<compile_context>
chip_gen: v6e
topology: v6e:2x2x1
jax: 0.10.0
libtpu: 0.0.40
codegen_flags: <defaults>
</compile_context>

<pallas_src>
import functools

import jax
import jax.numpy as jnp
from jax import lax
from jax.experimental import pallas as pl
from jax.experimental.pallas import tpu as pltpu
import numpy as np


def _round_up(x, m):
    return ((x + m - 1) // m) * m


def _conv_out_dim(d, ksize, stride, pad):
    return (d + 2 * pad - ksize) // stride + 1


def _pick_tm(m, tm_max=1024, min_tiles=2, quantum=256):
    """Largest M tile <= tm_max, but keep >= min_tiles grid steps when possible so
    dimension_semantics=('parallel',) spreads work over both v7x TensorCores."""
    tm = min(tm_max, _round_up(m, quantum))
    if m > quantum and _round_up(m, tm) // tm < min_tiles:
        tm = _round_up((m + min_tiles - 1) // min_tiles, quantum)
    return tm


# ----------------------------- Pallas kernel ---------------------------------
def conv_gemm_bn_relu_kernel(p_ref, w_ref, shift_ref, o_ref):
    """One M-tile GEMM (full K, VMEM-resident BN-scaled weight) + shift + ReLU."""
    acc = jnp.dot(p_ref[...], w_ref[...], preferred_element_type=jnp.float32)
    o_ref[...] = jnp.maximum(acc + shift_ref[...], 0.0).astype(o_ref.dtype)


def conv_gemm_bn_relu(patches, weight_km, shift, *, tm):
    """patches: [Mp, Kp] bf16, weight_km: [Kp, Cp] bf16 (BN scale folded),
    shift: [1, Cp] f32.  Returns [Mp, Cp] bf16."""
    Mp, Kp = patches.shape
    Cp = weight_km.shape[1]
    assert Mp % tm == 0 and Kp % 128 == 0 and Cp % 128 == 0, (Mp, Kp, Cp, tm)

    return pl.pallas_call(
        conv_gemm_bn_relu_kernel,
        out_shape=jax.ShapeDtypeStruct((Mp, Cp), jnp.bfloat16),   # bf16 out: half the writes
        grid_spec=pltpu.PrefetchScalarGridSpec(
            num_scalar_prefetch=0,
            grid=(Mp // tm,),
            in_specs=[
                pl.BlockSpec((tm, Kp), lambda i: (i, 0)),   # patch tile (streams over M)
                pl.BlockSpec((Kp, Cp), lambda i: (0, 0)),   # scaled weight (VMEM-resident)
                pl.BlockSpec((1, Cp), lambda i: (0, 0)),    # BN shift
            ],
            out_specs=pl.BlockSpec((tm, Cp), lambda i: (i, 0)),   # lane-dense (Cp=128)
        ),
        compiler_params=pltpu.CompilerParams(
            dimension_semantics=("parallel",),   # M tiles shard across v7x's 2 TCs
        ),
    )(patches, weight_km, shift)


# ------------------------------- JAX glue -------------------------------------
def im2col_3d_tap_minor(x, ksize, stride, pad, m_pad_to, k_pad_to=128):
    """x: [N, C, T, H, W] bf16 -> patches [Mp, Kp] bf16 with K ordered (c, kt, kh, kw).

    Channels-last view + taps stacked on the LAST axis: the 343x-inflated tensor is
    created directly in its final minor-dim layout (no big transpose), one trailing pad.
    """
    N, C, T, H, W = x.shape
    To = _conv_out_dim(T, ksize, stride, pad)
    Ho = _conv_out_dim(H, ksize, stride, pad)
    Wo = _conv_out_dim(W, ksize, stride, pad)

    xc = jnp.transpose(x, (0, 2, 3, 4, 1))                         # [N, T, H, W, C] (small)
    xc = jnp.pad(xc, ((0, 0), (pad, pad), (pad, pad), (pad, pad), (0, 0)))

    taps = []
    for kt in range(ksize):
        for kh in range(ksize):
            for kw in range(ksize):
                taps.append(
                    xc[:, kt:kt + stride * To:stride,
                          kh:kh + stride * Ho:stride,
                          kw:kw + stride * Wo:stride, :])          # [N, To, Ho, Wo, C]
    p = jnp.stack(taps, axis=-1)                                   # [N,To,Ho,Wo,C,343]
    M = N * To * Ho * Wo
    K = C * ksize ** 3
    p = p.reshape(M, K)                                            # K index = c*343 + tap

    Mp = _round_up(M, m_pad_to)
    Kp = _round_up(K, k_pad_to)
    p = jnp.pad(p, ((0, Mp - M), (0, Kp - K)))                     # zeros keep the GEMM exact
    return p, (M, K)


def _fold_bn(params, eps=1e-3):
    """Fold eval-mode BatchNorm3d(eps=1e-3) into the conv weights (f32):
    w'[o] = w[o]*gamma[o]/sqrt(var[o]+eps); shift[o] = beta[o] - mean[o]*gamma[o]/sqrt(var[o]+eps)."""
    gamma = params["bn_gamma"].astype(jnp.float32)
    beta = params["bn_beta"].astype(jnp.float32)
    mean = params["bn_mean"].astype(jnp.float32)
    var = params["bn_var"].astype(jnp.float32)
    scale = gamma * lax.rsqrt(var + eps)
    shift = beta - mean * scale
    w_folded = params["conv_w"].astype(jnp.float32) * scale[:, None, None, None, None]
    return w_folded, shift


@functools.partial(jax.jit, static_argnames=("ksize", "stride", "pad", "tm", "channels_last"))
def encoder_forward(imgs, params, *, ksize=7, stride=2, pad=3, tm=1024,
                    channels_last=False):
    """imgs: [N, C, T, H, W] float32 -> z: [N, 64, To, Ho, Wo] bf16
    (or [N, To, Ho, Wo, 64] bf16 if channels_last=True, skipping the NCDHW transpose)."""
    w_folded, shift = _fold_bn(params)              # BN scale folded into weights (f32)
    Cout = w_folded.shape[0]
    Cp = _round_up(Cout, 128)                       # lane-dense output channels

    N, C, T, H, W = imgs.shape
    To = _conv_out_dim(T, ksize, stride, pad)
    Ho = _conv_out_dim(H, ksize, stride, pad)
    Wo = _conv_out_dim(W, ksize, stride, pad)
    M = N * To * Ho * Wo
    tm_eff = _pick_tm(M, tm_max=tm)

    # bf16 MXU inputs (f32 accumulation in-kernel); halves the patch HBM stream.
    patches, (M, K) = im2col_3d_tap_minor(
        imgs.astype(jnp.bfloat16), ksize, stride, pad, m_pad_to=tm_eff)
    Kp = patches.shape[1]

    # Scaled weight as [Kp, Cp] bf16 matching the patch K ordering (c, kt, kh, kw).
    w_km = w_folded.reshape(Cout, -1).T             # [K, Cout] f32, scale already folded
    w_km = jnp.pad(w_km, ((0, Kp - K), (0, Cp - Cout))).astype(jnp.bfloat16)
    shift_p = jnp.pad(shift.reshape(1, Cout),
                      ((0, 0), (0, Cp - Cout))).astype(jnp.float32)

    out = conv_gemm_bn_relu(patches, w_km, shift_p, tm=tm_eff)     # [Mp, Cp] bf16
    # Pad rows (M..Mp) contain relu(shift) and pad cols (Cout..Cp) are zero; both are
    # sliced off here so the raw padded slab is never exposed to consumers.
    out = out[:M, :Cout]
    z = out.reshape(N, To, Ho, Wo, Cout)                           # channels-last slab
    if channels_last:
        return z
    # NCDHW to match the PyTorch module; slice+reshape+transpose fuse under jit.
    return jnp.transpose(z, (0, 4, 1, 2, 3))


# -------------------------- pure-JAX references --------------------------------
def encoder_reference_matched(imgs, params):
    """Conv+BN+ReLU with operands rounded to bf16 exactly as the kernel feeds the MXU
    (products then exact in f32, f32 accumulation, bf16 output) -> tight comparison."""
    w_folded, shift = _fold_bn(params)
    x = imgs.astype(jnp.bfloat16).astype(jnp.float32)
    w = w_folded.astype(jnp.bfloat16).astype(jnp.float32)
    y = lax.conv_general_dilated(
        x, w, window_strides=(2, 2, 2),
        padding=[(3, 3), (3, 3), (3, 3)],
        dimension_numbers=("NCDHW", "OIDHW", "NCDHW"),
        precision=lax.Precision.HIGHEST,
    )
    y = jnp.maximum(y + shift[None, :, None, None, None], 0.0)
    return y.astype(jnp.bfloat16).astype(jnp.float32)


def encoder_reference_f32(imgs, params):
    """Straight f32 Conv3d + BatchNorm3d(eps=1e-3, eval) + ReLU (the PyTorch semantics);
    used to bound the deliberate bf16 deviation of the kernel path."""
    eps = 1e-3
    y = lax.conv_general_dilated(
        imgs.astype(jnp.float32), params["conv_w"].astype(jnp.float32),
        window_strides=(2, 2, 2), padding=[(3, 3), (3, 3), (3, 3)],
        dimension_numbers=("NCDHW", "OIDHW", "NCDHW"),
        precision=lax.Precision.HIGHEST,
    )
    g = params["bn_gamma"][None, :, None, None, None]
    b = params["bn_beta"][None, :, None, None, None]
    m = params["bn_mean"][None, :, None, None, None]
    v = params["bn_var"][None, :, None, None, None]
    y = g * (y - m) / jnp.sqrt(v + eps) + b
    return jnp.maximum(y, 0.0)


# --------------------------------- main ----------------------------------------
if __name__ == "__main__":
    key = jax.random.PRNGKey(0)
    k_img, k_w, k_g, k_b, k_m, k_v = jax.random.split(key, 6)

    # Small shapes consistent with the I3D stem: N=2, C=3 (RGB), T=8, H=W=16.
    N, Cin, T, H, W = 2, 3, 8, 16, 16
    Cout = 64

    imgs = jax.random.normal(k_img, (N, Cin, T, H, W), dtype=jnp.float32)
    params = {
        "conv_w": 0.05 * jax.random.normal(k_w, (Cout, Cin, 7, 7, 7), dtype=jnp.float32),
        "bn_gamma": 1.0 + 0.1 * jax.random.normal(k_g, (Cout,), dtype=jnp.float32),
        "bn_beta": 0.1 * jax.random.normal(k_b, (Cout,), dtype=jnp.float32),
        "bn_mean": 0.1 * jax.random.normal(k_m, (Cout,), dtype=jnp.float32),
        "bn_var": jnp.abs(jax.random.normal(k_v, (Cout,), dtype=jnp.float32)) + 0.5,
    }

    z = jax.block_until_ready(encoder_forward(imgs, params))        # bf16, NCDHW
    assert z.shape == (N, Cout, T // 2, H // 2, W // 2), z.shape
    assert z.dtype == jnp.bfloat16, z.dtype
    z32 = np.asarray(z.astype(jnp.float32))

    # (a) tight check against an XLA conv on identical bf16 operands (kernel math).
    z_match = np.asarray(jax.block_until_ready(encoder_reference_matched(imgs, params)))
    np.testing.assert_allclose(z32, z_match, rtol=1e-2, atol=1e-3)

    # (b) loose check against the true f32 module semantics (bounds the bf16 deviation).
    z_f32 = np.asarray(jax.block_until_ready(encoder_reference_f32(imgs, params)))
    np.testing.assert_allclose(z32, z_f32, rtol=5e-2, atol=1e-1)

    print("KERNEL_OK")
</pallas_src>

<mosaic_0001>
module attributes {stable_mosaic.version = 11 : i64} {
  func.func @conv_gemm_bn_relu_kernel(%arg0: i32, %arg1: memref<256x1152xbf16, #tpu.memory_space<vmem>>, %arg2: memref<1152x128xbf16, #tpu.memory_space<vmem>>, %arg3: memref<1x128xf32, #tpu.memory_space<vmem>>, %arg4: memref<256x128xbf16, #tpu.memory_space<vmem>>) attributes {dimension_semantics = [#tpu.dimension_semantics<parallel>], iteration_bounds = array<i64: 2>, scalar_prefetch = 0 : i64, scratch_operands = 0 : i64, tpu.core_type = #tpu.core_type<tc>, window_params = [{transform_indices = @transform_0, window_bounds = array<i64: 256, 1152>}, {pipeline_mode = #tpu.pipeline_mode<synchronous>, transform_indices = @transform_1, window_bounds = array<i64: 1152, 128>}, {pipeline_mode = #tpu.pipeline_mode<synchronous>, transform_indices = @transform_2, window_bounds = array<i64: 1, 128>}, {transform_indices = @transform_3, window_bounds = array<i64: 256, 128>}]} {
    %c0 = arith.constant 0 : index
    %c0_0 = arith.constant 0 : index
    %0 = vector.load %arg1[%c0, %c0_0] : memref<256x1152xbf16, #tpu.memory_space<vmem>>, vector<256x1152xbf16>
    %c0_1 = arith.constant 0 : index
    %c0_2 = arith.constant 0 : index
    %1 = vector.load %arg2[%c0_1, %c0_2] : memref<1152x128xbf16, #tpu.memory_space<vmem>>, vector<1152x128xbf16>
    %cst = arith.constant dense<0.000000e+00> : vector<256x128xf32>
    %2 = tpu.matmul %0, %1, %cst {dimension_numbers = #tpu.dot_dimension_numbers<[1], [0], [0], [1], [0, 0, 1, 1], [], []>} : vector<256x1152xbf16>, vector<1152x128xbf16>, vector<256x128xf32> -> vector<256x128xf32>
    %c0_3 = arith.constant 0 : index
    %c0_4 = arith.constant 0 : index
    %3 = vector.load %arg3[%c0_3, %c0_4] : memref<1x128xf32, #tpu.memory_space<vmem>>, vector<1x128xf32>
    %4 = vector.broadcast %3 : vector<1x128xf32> to vector<256x128xf32>
    %5 = arith.addf %2, %4 : vector<256x128xf32>
    %cst_5 = arith.constant 0.000000e+00 : f32
    %6 = vector.broadcast %cst_5 : f32 to vector<256x128xf32>
    %7 = arith.maximumf %5, %6 : vector<256x128xf32>
    %8 = arith.truncf %7 : vector<256x128xf32> to vector<256x128xbf16>
    %c0_6 = arith.constant 0 : index
    %c0_7 = arith.constant 0 : index
    %9 = vector.load %arg4[%c0_6, %c0_7] : memref<256x128xbf16, #tpu.memory_space<vmem>>, vector<256x128xbf16>
    tpu.vector_store %arg4[%c0_6, %c0_7], %8 {strides = array<i32>} : memref<256x128xbf16, #tpu.memory_space<vmem>>, vector<256x128xbf16>,
    return
  }
  func.func @transform_0(%arg0: i32) -> (i32, i32) {
    %c0_i32 = arith.constant 0 : i32
    %c0_i32_0 = arith.constant 0 : i32
    return %arg0, %c0_i32 : i32, i32
  }
  func.func @transform_1(%arg0: i32) -> (i32, i32) {
    %c0_i32 = arith.constant 0 : i32
    %c0_i32_0 = arith.constant 0 : i32
    %c0_i32_1 = arith.constant 0 : i32
    return %c0_i32, %c0_i32_0 : i32, i32
  }
  func.func @transform_2(%arg0: i32) -> (i32, i32) {
    %c0_i32 = arith.constant 0 : i32
    %c0_i32_0 = arith.constant 0 : i32
    %c0_i32_1 = arith.constant 0 : i32
    return %c0_i32, %c0_i32_0 : i32, i32
  }
  func.func @transform_3(%arg0: i32) -> (i32, i32) {
    %c0_i32 = arith.constant 0 : i32
    %c0_i32_0 = arith.constant 0 : i32
    return %arg0, %c0_i32 : i32, i32
  }
}

</mosaic_0001>

<llo_original>
// kernel: encoder_forward.1
$region0: #{encoder_forward.1}
  #allocation0 [shape = 'u32[]', space=smem, size = 0x4, offset = 0x4, fixed_abs, tag = 'smem constant byte address 0x4 - core index']
  #allocation1 [shape = 'u32[144,128]{1,0:T(1,128)}', space=vmem, size = 0x12000, scoped, tag = 'internal scratch']
  %s0 = inlined_call_operand.vmem [shape: bf16[512,1152], index: 0, kind: input, shape index: {}]
  %s1 = inlined_call_operand.vmem [shape: bf16[1152,128], index: 1, kind: input, shape index: {}]
  %s2 = inlined_call_operand.vmem [shape: f32[1,128], index: 2, kind: input, shape index: {}]
  %s3 = inlined_call_operand.hbm [shape: bf16[512,128], index: 3, kind: output, shape index: {}]
  %s4 = sld [smem:[#allocation0]]
  $region45: #{encoder_forward.1} parent=0
    _
  %s6 = ssub.s32 1, %s4
  %s7 = scalar_select 0, %s6, %s4
  $region1: #{encoder_forward.1} parent=0
    #allocation2 [shape = 'u8[131072]{0}', space=vmem, size = 0x20000, scoped, tag = 'output window, operand 0']
    #allocation3 [shape = 's32[2]{0}', space=sflag, size = 0x8, scoped, tag = 'scoped memory for encoder_forward.1']
    %8 = vsyncpa [#allocation3], 0
    %s9 = scalar_lea.sflag [#allocation3], 1
    %10 = vsyncpa %s9, 0
    loop: start=0, step=1, limit=4
    $region2: #{encoder_forward.1} parent=1 // loop_pre_header
      _
    $region3: #{encoder_forward.1} parent=1 // loop_header
      %s12 = sphi 0, %s16
      %p13 = scmp.ge.s32.totalorder %s12, 4
      %s22 = sphi 0, %s24
      %s25 = sphi 0, %s22
      %s26 = sphi 0, %s25
      %s42 = sphi 0, %s26
      %s46 = sphi 0, %s46
      %s48 = sphi 0, %s46
      %s49 = sphi 0, %s48
      %s63 = sphi 0, %s49
      %s67 = sphi 0, %s67
      %s69 = sphi 0, %s67
      %s70 = sphi 0, %s69
      %s84 = sphi 0, %s70
      %s90 = sphi 0, %s92
      %s93 = sphi 0, %s90
      %s94 = sphi 0, %s93
      %s110 = sphi 0, %s94
    $region4: #{encoder_forward.1} parent=1 // loop_header_branch
      %15 = sbr.rel (%p13) target = $region8
    $region5: #{encoder_forward.1} parent=1 // loop_body
      %s17 = ssub.s32 %s12, 1
      %s18 = ssub.s32 %s12, 2
      %s19 = sadd.s32 %s12, 1
      %s20 = ssub.s32 %s12, %s19
      %p21 = scmp.eq.s32.totalorder %s20, 0
      %s23 = sadd.s32 %s22, 1
      %s24 = scalar_select %p21, %s22, %s23
      %p27 = pneg %p21
      %p28 = scmp.eq.s32.totalorder %s12, 1
      %p29 = por %p27, %p28
      %p30 = scmp.ne.s32.totalorder %s22, %s25
      %p31 = scmp.eq.s32.totalorder %s12, 0
      %p32 = por %p30, %p31
      %p33 = scmp.ne.s32.totalorder %s22, %s25
      %p34 = scmp.eq.s32.totalorder %s17, 1
      %p35 = por %p33, %p34
      %p36 = scmp.ne.s32.totalorder %s25, %s26
      %p37 = scmp.eq.s32.totalorder %s17, 0
      %p38 = por %p36, %p37
      %p39 = scmp.ne.s32.totalorder %s25, %s26
      %p40 = scmp.eq.s32.totalorder %s18, 1
      %p41 = por %p39, %p40
      %p43 = scmp.ne.s32.totalorder %s26, %s42
      %p44 = scmp.eq.s32.totalorder %s18, 0
      %p45 = por %p43, %p44
      %s47 = sadd.s32 %s46, 1
      %p50 = scmp.eq.s32.totalorder %s12, 1
      %p51 = scmp.ne.s32.totalorder %s46, %s48
      %p52 = scmp.eq.s32.totalorder %s12, 0
      %p53 = por %p51, %p52
      %p54 = scmp.ne.s32.totalorder %s46, %s48
      %p55 = scmp.eq.s32.totalorder %s17, 1
      %p56 = por %p54, %p55
      %p57 = scmp.ne.s32.totalorder %s48, %s49
      %p58 = scmp.eq.s32.totalorder %s17, 0
      %p59 = por %p57, %p58
      %p60 = scmp.ne.s32.totalorder %s48, %s49
      %p61 = scmp.eq.s32.totalorder %s18, 1
      %p62 = por %p60, %p61
      %p64 = scmp.ne.s32.totalorder %s49, %s63
      %p65 = scmp.eq.s32.totalorder %s18, 0
      %p66 = por %p64, %p65
      %s68 = sadd.s32 %s67, 1
      %p71 = scmp.eq.s32.totalorder %s12, 1
      %p72 = scmp.ne.s32.totalorder %s67, %s69
      %p73 = scmp.eq.s32.totalorder %s12, 0
      %p74 = por %p72, %p73
      %p75 = scmp.ne.s32.totalorder %s67, %s69
      %p76 = scmp.eq.s32.totalorder %s17, 1
      %p77 = por %p75, %p76
      %p78 = scmp.ne.s32.totalorder %s69, %s70
      %p79 = scmp.eq.s32.totalorder %s17, 0
      %p80 = por %p78, %p79
      %p81 = scmp.ne.s32.totalorder %s69, %s70
      %p82 = scmp.eq.s32.totalorder %s18, 1
      %p83 = por %p81, %p82
      %p85 = scmp.ne.s32.totalorder %s70, %s84
      %p86 = scmp.eq.s32.totalorder %s18, 0
      %p87 = por %p85, %p86
      %s88 = ssub.s32 %s12, %s19
      %p89 = scmp.eq.s32.totalorder %s88, 0
      %s91 = sadd.s32 %s90, 1
      %s92 = scalar_select %p89, %s90, %s91
      %p95 = pneg %p89
      %p96 = scmp.eq.s32.totalorder %s12, 1
      %p97 = por %p95, %p96
      %p98 = scmp.ne.s32.totalorder %s90, %s93
      %p99 = scmp.eq.s32.totalorder %s12, 0
      %p100 = por %p98, %p99
      %p101 = scmp.ne.s32.totalorder %s90, %s93
      %p102 = scmp.eq.s32.totalorder %s17, 1
      %p103 = por %p101, %p102
      %p104 = scmp.ne.s32.totalorder %s93, %s94
      %p105 = scmp.eq.s32.totalorder %s17, 0
      %p106 = por %p104, %p105
      %p107 = scmp.ne.s32.totalorder %s93, %s94
      %p108 = scmp.eq.s32.totalorder %s18, 1
      %p109 = por %p107, %p108
      %p111 = scmp.ne.s32.totalorder %s94, %s110
      %p112 = scmp.eq.s32.totalorder %s18, 0
      %p113 = por %p111, %p112
      %p114 = scmp.le.s32.totalorder 1, %s12
      %p115 = scmp.lt.s32.totalorder %s12, 3
      %p116 = pnand %p114, %p115
      %p117 = pneg %p116
      // Predicated region
      $region9: #{encoder_forward.1} parent=5 // pred_check
        _
      $region10: #{encoder_forward.1} parent=5 // pred_check_branch
        %119 = sbr.rel (%p116) target = $region12
      $region11: #{encoder_forward.1} parent=5 // pred_region
        %s120 = ssub.s32 %s12, 1
        // Predicated region
        $region13: #{encoder_forward.1} parent=11 // pred_check
          %p121 = pneg %p59
        $region14: #{encoder_forward.1} parent=11 // pred_check_branch
          %123 = sbr.rel (%p121) target = $region16
        $region15: #{encoder_forward.1} parent=11 // pred_region
          _
        $region16: #{encoder_forward.1} parent=11 // pred_fallthru
          _
        // Predicated region
        $region17: #{encoder_forward.1} parent=11 // pred_check
          %p124 = pneg %p80
        $region18: #{encoder_forward.1} parent=11 // pred_check_branch
          %126 = sbr.rel (%p124) target = $region20
        $region19: #{encoder_forward.1} parent=11 // pred_region
          _
        $region20: #{encoder_forward.1} parent=11 // pred_fallthru
          _
      $region12: #{encoder_forward.1} parent=5 // pred_fallthru
        _
      %p127 = scmp.lt.s32.totalorder %s12, 2
      // Predicated region
      $region21: #{encoder_forward.1} parent=5 // pred_check
        %p128 = pneg %p127
      $region22: #{encoder_forward.1} parent=5 // pred_check_branch
        %130 = sbr.rel (%p128) target = $region24
      $region23: #{encoder_forward.1} parent=5 // pred_region
        // Predicated region
        $region25: #{encoder_forward.1} parent=23 // pred_check
          %p131 = pneg %p32
        $region26: #{encoder_forward.1} parent=23 // pred_check_branch
          %133 = sbr.rel (%p131) target = $region28
        $region27: #{encoder_forward.1} parent=23 // pred_region
          %s134 = smul.u32 32, %s12
          %p135 = scmp.lt.s32.totalorder %s134, 63
          %s136 = scalar_select %p135, %s134, 63
          %s137 = smul.addr %s136, 9
          %s138 = smul.addr %s137, 4
          %s139 = scalar_lea.vmem %s0, %s138
          %s140 = smul.u32 32, %s12
        $region28: #{encoder_forward.1} parent=23 // pred_fallthru
          _
      $region24: #{encoder_forward.1} parent=5 // pred_fallthru
        _
      %p141 = scmp.le.s32.totalorder 1, %s12
      %p142 = scmp.lt.s32.totalorder %s12, 3
      %p143 = pnand %p141, %p142
      %p144 = pneg %p143
      // Predicated region
      $region29: #{encoder_forward.1} parent=5 // pred_check
        _
      $region30: #{encoder_forward.1} parent=5 // pred_check_branch
        %146 = sbr.rel (%p143) target = $region32
      $region31: #{encoder_forward.1} parent=5 // pred_region
        %s147 = ssub.s32 %s12, 1
        %s148 = smul.u32 32, %s17
        %p149 = scmp.lt.s32.totalorder %s148, 63
        %s150 = scalar_select %p149, %s148, 63
        %s151 = smul.addr %s150, 9
        %s152 = smul.addr %s151, 4
        %s153 = scalar_lea.vmem %s0, %s152
        %p154 = pneg %p38
        %p155 = pneg %p35
        %p156 = pneg %p59
        %p157 = pneg %p56
        %p158 = pneg %p80
        %p159 = pneg %p77
        %p160 = pneg %p106
        %p161 = pneg %p103
        %s162 = sand.u32 %s93, 1
        %s163 = scalar_lea.sflag [#allocation3], %s162
        %s164 = sand.u32 %s93, 1
        %s165 = smul.addr %s164, 128
        %s166 = scalar_lea.vmem [#allocation2], %s165
        %s167 = smul.u32 32, %s17
        %p168 = scmp.lt.s32.totalorder %s167, 63
        %s169 = scalar_select %p168, %s167, 63
        %s170 = smul.addr %s169, 9
        %s171 = smul.addr %s170, 4
        %s172 = scalar_lea.vmem %s0, %s171
        %s173 = smul.u32 32, %s17
        %s174 = smul.u32 32, %s17
        %v176 = vld [vmem:[%s172] sm:$0xff]
        %v177 = vld [vmem:[%s172 + $0x8] sm:$0xff]
        %v178 = vld [vmem:[%s172 + $0x10] sm:$0xff]
        %v179 = vld [vmem:[%s172 + $0x18] sm:$0xff]
        %v180 = vld [vmem:[%s172 + $0x20] sm:$0xf]
        %v181 = vld [vmem:[%s172 + $0x24] sm:$0xff]
        %v182 = vld [vmem:[%s172 + $0x2c] sm:$0xff]
        %v183 = vld [vmem:[%s172 + $0x34] sm:$0xff]
        %v184 = vld [vmem:[%s172 + $0x3c] sm:$0xff]
        %v185 = vld [vmem:[%s172 + $0x44] sm:$0xf]
        %v186 = vld [vmem:[%s172 + $0x48] sm:$0xff]
        %v187 = vld [vmem:[%s172 + $0x50] sm:$0xff]
        %v188 = vld [vmem:[%s172 + $0x58] sm:$0xff]
        %v189 = vld [vmem:[%s172 + $0x60] sm:$0xff]
        %v190 = vld [vmem:[%s172 + $0x68] sm:$0xf]
        %v191 = vld [vmem:[%s172 + $0x6c] sm:$0xff]
        %v192 = vld [vmem:[%s172 + $0x74] sm:$0xff]
        %v193 = vld [vmem:[%s172 + $0x7c] sm:$0xff]
        %v194 = vld [vmem:[%s172 + $0x84] sm:$0xff]
        %v195 = vld [vmem:[%s172 + $0x8c] sm:$0xf]
        %v196 = vld [vmem:[%s172 + $0x90] sm:$0xff]
        %v197 = vld [vmem:[%s172 + $0x98] sm:$0xff]
        %v198 = vld [vmem:[%s172 + $0xa0] sm:$0xff]
        %v199 = vld [vmem:[%s172 + $0xa8] sm:$0xff]
        %v200 = vld [vmem:[%s172 + $0xb0] sm:$0xf]
        %v201 = vld [vmem:[%s172 + $0xb4] sm:$0xff]
        %v202 = vld [vmem:[%s172 + $0xbc] sm:$0xff]
        %v203 = vld [vmem:[%s172 + $0xc4] sm:$0xff]
        %v204 = vld [vmem:[%s172 + $0xcc] sm:$0xff]
        %v205 = vld [vmem:[%s172 + $0xd4] sm:$0xf]
        %v206 = vld [vmem:[%s172 + $0xd8] sm:$0xff]
        %v207 = vld [vmem:[%s172 + $0xe0] sm:$0xff]
        %v208 = vld [vmem:[%s172 + $0xe8] sm:$0xff]
        %v209 = vld [vmem:[%s172 + $0xf0] sm:$0xff]
        %v210 = vld [vmem:[%s172 + $0xf8] sm:$0xf]
        %v211 = vld [vmem:[%s172 + $0xfc] sm:$0xff]
        %v212 = vld [vmem:[%s172 + $0x104] sm:$0xff]
        %v213 = vld [vmem:[%s172 + $0x10c] sm:$0xff]
        %v214 = vld [vmem:[%s172 + $0x114] sm:$0xff]
        %v215 = vld [vmem:[%s172 + $0x11c] sm:$0xf]
        %v216 = vld [vmem:[%s172 + $0x120] sm:$0xff]
        %v217 = vld [vmem:[%s172 + $0x128] sm:$0xff]
        %v218 = vld [vmem:[%s172 + $0x130] sm:$0xff]
        %v219 = vld [vmem:[%s172 + $0x138] sm:$0xff]
        %v220 = vld [vmem:[%s172 + $0x140] sm:$0xf]
        %v221 = vld [vmem:[%s172 + $0x144] sm:$0xff]
        %v222 = vld [vmem:[%s172 + $0x14c] sm:$0xff]
        %v223 = vld [vmem:[%s172 + $0x154] sm:$0xff]
        %v224 = vld [vmem:[%s172 + $0x15c] sm:$0xff]
        %v225 = vld [vmem:[%s172 + $0x164] sm:$0xf]
        %v226 = vld [vmem:[%s172 + $0x168] sm:$0xff]
        %v227 = vld [vmem:[%s172 + $0x170] sm:$0xff]
        %v228 = vld [vmem:[%s172 + $0x178] sm:$0xff]
        %v229 = vld [vmem:[%s172 + $0x180] sm:$0xff]
        %v230 = vld [vmem:[%s172 + $0x188] sm:$0xf]
        %v231 = vld [vmem:[%s172 + $0x18c] sm:$0xff]
        %v232 = vld [vmem:[%s172 + $0x194] sm:$0xff]
        %v233 = vld [vmem:[%s172 + $0x19c] sm:$0xff]
        %v234 = vld [vmem:[%s172 + $0x1a4] sm:$0xff]
        %v235 = vld [vmem:[%s172 + $0x1ac] sm:$0xf]
        %v236 = vld [vmem:[%s172 + $0x1b0] sm:$0xff]
        %v237 = vld [vmem:[%s172 + $0x1b8] sm:$0xff]
        %v238 = vld [vmem:[%s172 + $0x1c0] sm:$0xff]
        %v239 = vld [vmem:[%s172 + $0x1c8] sm:$0xff]
        %v240 = vld [vmem:[%s172 + $0x1d0] sm:$0xf]
        %v241 = vld [vmem:[%s172 + $0x1d4] sm:$0xff]
        %v242 = vld [vmem:[%s172 + $0x1dc] sm:$0xff]
        %v243 = vld [vmem:[%s172 + $0x1e4] sm:$0xff]
        %v244 = vld [vmem:[%s172 + $0x1ec] sm:$0xff]
        %v245 = vld [vmem:[%s172 + $0x1f4] sm:$0xf]
        %v246 = vld [vmem:[%s172 + $0x1f8] sm:$0xff]
        %v247 = vld [vmem:[%s172 + $0x200] sm:$0xff]
        %v248 = vld [vmem:[%s172 + $0x208] sm:$0xff]
        %v249 = vld [vmem:[%s172 + $0x210] sm:$0xff]
        %v250 = vld [vmem:[%s172 + $0x218] sm:$0xf]
        %v251 = vld [vmem:[%s172 + $0x21c] sm:$0xff]
        %v252 = vld [vmem:[%s172 + $0x224] sm:$0xff]
        %v253 = vld [vmem:[%s172 + $0x22c] sm:$0xff]
        %v254 = vld [vmem:[%s172 + $0x234] sm:$0xff]
        %v255 = vld [vmem:[%s172 + $0x23c] sm:$0xf]
        %v256 = vld [vmem:[%s172 + $0x240] sm:$0xff]
        %v257 = vld [vmem:[%s172 + $0x248] sm:$0xff]
        %v258 = vld [vmem:[%s172 + $0x250] sm:$0xff]
        %v259 = vld [vmem:[%s172 + $0x258] sm:$0xff]
        %v260 = vld [vmem:[%s172 + $0x260] sm:$0xf]
        %v261 = vld [vmem:[%s172 + $0x264] sm:$0xff]
        %v262 = vld [vmem:[%s172 + $0x26c] sm:$0xff]
        %v263 = vld [vmem:[%s172 + $0x274] sm:$0xff]
        %v264 = vld [vmem:[%s172 + $0x27c] sm:$0xff]
        %v265 = vld [vmem:[%s172 + $0x284] sm:$0xf]
        %v266 = vld [vmem:[%s172 + $0x288] sm:$0xff]
        %v267 = vld [vmem:[%s172 + $0x290] sm:$0xff]
        %v268 = vld [vmem:[%s172 + $0x298] sm:$0xff]
        %v269 = vld [vmem:[%s172 + $0x2a0] sm:$0xff]
        %v270 = vld [vmem:[%s172 + $0x2a8] sm:$0xf]
        %v271 = vld [vmem:[%s172 + $0x2ac] sm:$0xff]
        %v272 = vld [vmem:[%s172 + $0x2b4] sm:$0xff]
        %v273 = vld [vmem:[%s172 + $0x2bc] sm:$0xff]
        %v274 = vld [vmem:[%s172 + $0x2c4] sm:$0xff]
        %v275 = vld [vmem:[%s172 + $0x2cc] sm:$0xf]
        %v276 = vld [vmem:[%s172 + $0x2d0] sm:$0xff]
        %v277 = vld [vmem:[%s172 + $0x2d8] sm:$0xff]
        %v278 = vld [vmem:[%s172 + $0x2e0] sm:$0xff]
        %v279 = vld [vmem:[%s172 + $0x2e8] sm:$0xff]
        %v280 = vld [vmem:[%s172 + $0x2f0] sm:$0xf]
        %v281 = vld [vmem:[%s172 + $0x2f4] sm:$0xff]
        %v282 = vld [vmem:[%s172 + $0x2fc] sm:$0xff]
        %v283 = vld [vmem:[%s172 + $0x304] sm:$0xff]
        %v284 = vld [vmem:[%s172 + $0x30c] sm:$0xff]
        %v285 = vld [vmem:[%s172 + $0x314] sm:$0xf]
        %v286 = vld [vmem:[%s172 + $0x318] sm:$0xff]
        %v287 = vld [vmem:[%s172 + $0x320] sm:$0xff]
        %v288 = vld [vmem:[%s172 + $0x328] sm:$0xff]
        %v289 = vld [vmem:[%s172 + $0x330] sm:$0xff]
        %v290 = vld [vmem:[%s172 + $0x338] sm:$0xf]
        %v291 = vld [vmem:[%s172 + $0x33c] sm:$0xff]
        %v292 = vld [vmem:[%s172 + $0x344] sm:$0xff]
        %v293 = vld [vmem:[%s172 + $0x34c] sm:$0xff]
        %v294 = vld [vmem:[%s172 + $0x354] sm:$0xff]
        %v295 = vld [vmem:[%s172 + $0x35c] sm:$0xf]
        %v296 = vld [vmem:[%s172 + $0x360] sm:$0xff]
        %v297 = vld [vmem:[%s172 + $0x368] sm:$0xff]
        %v298 = vld [vmem:[%s172 + $0x370] sm:$0xff]
        %v299 = vld [vmem:[%s172 + $0x378] sm:$0xff]
        %v300 = vld [vmem:[%s172 + $0x380] sm:$0xf]
        %v301 = vld [vmem:[%s172 + $0x384] sm:$0xff]
        %v302 = vld [vmem:[%s172 + $0x38c] sm:$0xff]
        %v303 = vld [vmem:[%s172 + $0x394] sm:$0xff]
        %v304 = vld [vmem:[%s172 + $0x39c] sm:$0xff]
        %v305 = vld [vmem:[%s172 + $0x3a4] sm:$0xf]
        %v306 = vld [vmem:[%s172 + $0x3a8] sm:$0xff]
        %v307 = vld [vmem:[%s172 + $0x3b0] sm:$0xff]
        %v308 = vld [vmem:[%s172 + $0x3b8] sm:$0xff]
        %v309 = vld [vmem:[%s172 + $0x3c0] sm:$0xff]
        %v310 = vld [vmem:[%s172 + $0x3c8] sm:$0xf]
        %v311 = vld [vmem:[%s172 + $0x3cc] sm:$0xff]
        %v312 = vld [vmem:[%s172 + $0x3d4] sm:$0xff]
        %v313 = vld [vmem:[%s172 + $0x3dc] sm:$0xff]
        %v314 = vld [vmem:[%s172 + $0x3e4] sm:$0xff]
        %v315 = vld [vmem:[%s172 + $0x3ec] sm:$0xf]
        %v316 = vld [vmem:[%s172 + $0x3f0] sm:$0xff]
        %v317 = vld [vmem:[%s172 + $0x3f8] sm:$0xff]
        %v318 = vld [vmem:[%s172 + $0x400] sm:$0xff]
        %v319 = vld [vmem:[%s172 + $0x408] sm:$0xff]
        %v320 = vld [vmem:[%s172 + $0x410] sm:$0xf]
        %v321 = vld [vmem:[%s172 + $0x414] sm:$0xff]
        %v322 = vld [vmem:[%s172 + $0x41c] sm:$0xff]
        %v323 = vld [vmem:[%s172 + $0x424] sm:$0xff]
        %v324 = vld [vmem:[%s172 + $0x42c] sm:$0xff]
        %v325 = vld [vmem:[%s172 + $0x434] sm:$0xf]
        %v326 = vld [vmem:[%s172 + $0x438] sm:$0xff]
        %v327 = vld [vmem:[%s172 + $0x440] sm:$0xff]
        %v328 = vld [vmem:[%s172 + $0x448] sm:$0xff]
        %v329 = vld [vmem:[%s172 + $0x450] sm:$0xff]
        %v330 = vld [vmem:[%s172 + $0x458] sm:$0xf]
        %v331 = vld [vmem:[%s172 + $0x45c] sm:$0xff]
        %v332 = vld [vmem:[%s172 + $0x464] sm:$0xff]
        %v333 = vld [vmem:[%s172 + $0x46c] sm:$0xff]
        %v334 = vld [vmem:[%s172 + $0x474] sm:$0xff]
        %v335 = vld [vmem:[%s172 + $0x47c] sm:$0xf]
        %v336 = vld [vmem:[%s1] sm:$0xf]
        %v337 = vld [vmem:[%s1 + $0x4] sm:$0xf]
        %v338 = vld [vmem:[%s1 + $0x8] sm:$0xf]
        %v339 = vld [vmem:[%s1 + $0xc] sm:$0xf]
        %v340 = vld [vmem:[%s1 + $0x10] sm:$0xf]
        %v341 = vld [vmem:[%s1 + $0x14] sm:$0xf]
        %v342 = vld [vmem:[%s1 + $0x18] sm:$0xf]
        %v343 = vld [vmem:[%s1 + $0x1c] sm:$0xf]
        %v344 = vld [vmem:[%s1 + $0x20] sm:$0xf]
        %v345 = vld [vmem:[%s1 + $0x24] sm:$0xf]
        %v346 = vld [vmem:[%s1 + $0x28] sm:$0xf]
        %v347 = vld [vmem:[%s1 + $0x2c] sm:$0xf]
        %v348 = vld [vmem:[%s1 + $0x30] sm:$0xf]
        %v349 = vld [vmem:[%s1 + $0x34] sm:$0xf]
        %v350 = vld [vmem:[%s1 + $0x38] sm:$0xf]
        %v351 = vld [vmem:[%s1 + $0x3c] sm:$0xf]
        %v352 = vld [vmem:[%s1 + $0x40] sm:$0xf]
        %v353 = vld [vmem:[%s1 + $0x44] sm:$0xf]
        %v354 = vld [vmem:[%s1 + $0x48] sm:$0xf]
        %v355 = vld [vmem:[%s1 + $0x4c] sm:$0xf]
        %v356 = vld [vmem:[%s1 + $0x50] sm:$0xf]
        %v357 = vld [vmem:[%s1 + $0x54] sm:$0xf]
        %v358 = vld [vmem:[%s1 + $0x58] sm:$0xf]
        %v359 = vld [vmem:[%s1 + $0x5c] sm:$0xf]
        %v360 = vld [vmem:[%s1 + $0x60] sm:$0xf]
        %v361 = vld [vmem:[%s1 + $0x64] sm:$0xf]
        %v362 = vld [vmem:[%s1 + $0x68] sm:$0xf]
        %v363 = vld [vmem:[%s1 + $0x6c] sm:$0xf]
        %v364 = vld [vmem:[%s1 + $0x70] sm:$0xf]
        %v365 = vld [vmem:[%s1 + $0x74] sm:$0xf]
        %v366 = vld [vmem:[%s1 + $0x78] sm:$0xf]
        %v367 = vld [vmem:[%s1 + $0x7c] sm:$0xf]
        %v368 = vld [vmem:[%s1 + $0x80] sm:$0xf]
        %v369 = vld [vmem:[%s1 + $0x84] sm:$0xf]
        %v370 = vld [vmem:[%s1 + $0x88] sm:$0xf]
        %v371 = vld [vmem:[%s1 + $0x8c] sm:$0xf]
        %v372 = vld [vmem:[%s1 + $0x90] sm:$0xf]
        %v373 = vld [vmem:[%s1 + $0x94] sm:$0xf]
        %v374 = vld [vmem:[%s1 + $0x98] sm:$0xf]
        %v375 = vld [vmem:[%s1 + $0x9c] sm:$0xf]
        %v376 = vld [vmem:[%s1 + $0xa0] sm:$0xf]
        %v377 = vld [vmem:[%s1 + $0xa4] sm:$0xf]
        %v378 = vld [vmem:[%s1 + $0xa8] sm:$0xf]
        %v379 = vld [vmem:[%s1 + $0xac] sm:$0xf]
        %v380 = vld [vmem:[%s1 + $0xb0] sm:$0xf]
        %v381 = vld [vmem:[%s1 + $0xb4] sm:$0xf]
        %v382 = vld [vmem:[%s1 + $0xb8] sm:$0xf]
        %v383 = vld [vmem:[%s1 + $0xbc] sm:$0xf]
        %v384 = vld [vmem:[%s1 + $0xc0] sm:$0xf]
        %v385 = vld [vmem:[%s1 + $0xc4] sm:$0xf]
        %v386 = vld [vmem:[%s1 + $0xc8] sm:$0xf]
        %v387 = vld [vmem:[%s1 + $0xcc] sm:$0xf]
        %v388 = vld [vmem:[%s1 + $0xd0] sm:$0xf]
        %v389 = vld [vmem:[%s1 + $0xd4] sm:$0xf]
        %v390 = vld [vmem:[%s1 + $0xd8] sm:$0xf]
        %v391 = vld [vmem:[%s1 + $0xdc] sm:$0xf]
        %v392 = vld [vmem:[%s1 + $0xe0] sm:$0xf]
        %v393 = vld [vmem:[%s1 + $0xe4] sm:$0xf]
        %v394 = vld [vmem:[%s1 + $0xe8] sm:$0xf]
        %v395 = vld [vmem:[%s1 + $0xec] sm:$0xf]
        %v396 = vld [vmem:[%s1 + $0xf0] sm:$0xf]
        %v397 = vld [vmem:[%s1 + $0xf4] sm:$0xf]
        %v398 = vld [vmem:[%s1 + $0xf8] sm:$0xf]
        %v399 = vld [vmem:[%s1 + $0xfc] sm:$0xf]
        %v400 = vld [vmem:[%s1 + $0x100] sm:$0xf]
        %v401 = vld [vmem:[%s1 + $0x104] sm:$0xf]
        %v402 = vld [vmem:[%s1 + $0x108] sm:$0xf]
        %v403 = vld [vmem:[%s1 + $0x10c] sm:$0xf]
        %v404 = vld [vmem:[%s1 + $0x110] sm:$0xf]
        %v405 = vld [vmem:[%s1 + $0x114] sm:$0xf]
        %v406 = vld [vmem:[%s1 + $0x118] sm:$0xf]
        %v407 = vld [vmem:[%s1 + $0x11c] sm:$0xf]
        %v408 = vld [vmem:[%s1 + $0x120] sm:$0xf]
        %v409 = vld [vmem:[%s1 + $0x124] sm:$0xf]
        %v410 = vld [vmem:[%s1 + $0x128] sm:$0xf]
        %v411 = vld [vmem:[%s1 + $0x12c] sm:$0xf]
        %v412 = vld [vmem:[%s1 + $0x130] sm:$0xf]
        %v413 = vld [vmem:[%s1 + $0x134] sm:$0xf]
        %v414 = vld [vmem:[%s1 + $0x138] sm:$0xf]
        %v415 = vld [vmem:[%s1 + $0x13c] sm:$0xf]
        %v416 = vld [vmem:[%s1 + $0x140] sm:$0xf]
        %v417 = vld [vmem:[%s1 + $0x144] sm:$0xf]
        %v418 = vld [vmem:[%s1 + $0x148] sm:$0xf]
        %v419 = vld [vmem:[%s1 + $0x14c] sm:$0xf]
        %v420 = vld [vmem:[%s1 + $0x150] sm:$0xf]
        %v421 = vld [vmem:[%s1 + $0x154] sm:$0xf]
        %v422 = vld [vmem:[%s1 + $0x158] sm:$0xf]
        %v423 = vld [vmem:[%s1 + $0x15c] sm:$0xf]
        %v424 = vld [vmem:[%s1 + $0x160] sm:$0xf]
        %v425 = vld [vmem:[%s1 + $0x164] sm:$0xf]
        %v426 = vld [vmem:[%s1 + $0x168] sm:$0xf]
        %v427 = vld [vmem:[%s1 + $0x16c] sm:$0xf]
        %v428 = vld [vmem:[%s1 + $0x170] sm:$0xf]
        %v429 = vld [vmem:[%s1 + $0x174] sm:$0xf]
        %v430 = vld [vmem:[%s1 + $0x178] sm:$0xf]
        %v431 = vld [vmem:[%s1 + $0x17c] sm:$0xf]
        %v432 = vld [vmem:[%s1 + $0x180] sm:$0xf]
        %v433 = vld [vmem:[%s1 + $0x184] sm:$0xf]
        %v434 = vld [vmem:[%s1 + $0x188] sm:$0xf]
        %v435 = vld [vmem:[%s1 + $0x18c] sm:$0xf]
        %v436 = vld [vmem:[%s1 + $0x190] sm:$0xf]
        %v437 = vld [vmem:[%s1 + $0x194] sm:$0xf]
        %v438 = vld [vmem:[%s1 + $0x198] sm:$0xf]
        %v439 = vld [vmem:[%s1 + $0x19c] sm:$0xf]
        %v440 = vld [vmem:[%s1 + $0x1a0] sm:$0xf]
        %v441 = vld [vmem:[%s1 + $0x1a4] sm:$0xf]
        %v442 = vld [vmem:[%s1 + $0x1a8] sm:$0xf]
        %v443 = vld [vmem:[%s1 + $0x1ac] sm:$0xf]
        %v444 = vld [vmem:[%s1 + $0x1b0] sm:$0xf]
        %v445 = vld [vmem:[%s1 + $0x1b4] sm:$0xf]
        %v446 = vld [vmem:[%s1 + $0x1b8] sm:$0xf]
        %v447 = vld [vmem:[%s1 + $0x1bc] sm:$0xf]
        %v448 = vld [vmem:[%s1 + $0x1c0] sm:$0xf]
        %v449 = vld [vmem:[%s1 + $0x1c4] sm:$0xf]
        %v450 = vld [vmem:[%s1 + $0x1c8] sm:$0xf]
        %v451 = vld [vmem:[%s1 + $0x1cc] sm:$0xf]
        %v452 = vld [vmem:[%s1 + $0x1d0] sm:$0xf]
        %v453 = vld [vmem:[%s1 + $0x1d4] sm:$0xf]
        %v454 = vld [vmem:[%s1 + $0x1d8] sm:$0xf]
        %v455 = vld [vmem:[%s1 + $0x1dc] sm:$0xf]
        %v456 = vld [vmem:[%s1 + $0x1e0] sm:$0xf]
        %v457 = vld [vmem:[%s1 + $0x1e4] sm:$0xf]
        %v458 = vld [vmem:[%s1 + $0x1e8] sm:$0xf]
        %v459 = vld [vmem:[%s1 + $0x1ec] sm:$0xf]
        %v460 = vld [vmem:[%s1 + $0x1f0] sm:$0xf]
        %v461 = vld [vmem:[%s1 + $0x1f4] sm:$0xf]
        %v462 = vld [vmem:[%s1 + $0x1f8] sm:$0xf]
        %v463 = vld [vmem:[%s1 + $0x1fc] sm:$0xf]
        %v464 = vld [vmem:[%s1 + $0x200] sm:$0xf]
        %v465 = vld [vmem:[%s1 + $0x204] sm:$0xf]
        %v466 = vld [vmem:[%s1 + $0x208] sm:$0xf]
        %v467 = vld [vmem:[%s1 + $0x20c] sm:$0xf]
        %v468 = vld [vmem:[%s1 + $0x210] sm:$0xf]
        %v469 = vld [vmem:[%s1 + $0x214] sm:$0xf]
        %v470 = vld [vmem:[%s1 + $0x218] sm:$0xf]
        %v471 = vld [vmem:[%s1 + $0x21c] sm:$0xf]
        %v472 = vld [vmem:[%s1 + $0x220] sm:$0xf]
        %v473 = vld [vmem:[%s1 + $0x224] sm:$0xf]
        %v474 = vld [vmem:[%s1 + $0x228] sm:$0xf]
        %v475 = vld [vmem:[%s1 + $0x22c] sm:$0xf]
        %v476 = vld [vmem:[%s1 + $0x230] sm:$0xf]
        %v477 = vld [vmem:[%s1 + $0x234] sm:$0xf]
        %v478 = vld [vmem:[%s1 + $0x238] sm:$0xf]
        %v479 = vld [vmem:[%s1 + $0x23c] sm:$0xf]
        %v480 = vld [vmem:[%s2] sm:$0x1]
        %v482 = vlaneseq
        %v483 = vshrl.u32 %v482, 7
        %v484 = vsub.s32 0, %v483
        %v485 = vrot.slane %v480, %v484
        %v647 = vunpack.c.l.b16 %v176
        %v648 = vunpack.c.h.b16 %v176
        %v649 = vunpack.c.l.b16 %v177
        %v650 = vunpack.c.h.b16 %v177
        %v651 = vunpack.c.l.b16 %v178
        %v652 = vunpack.c.h.b16 %v178
        %v653 = vunpack.c.l.b16 %v179
        %v654 = vunpack.c.h.b16 %v179
        %v655 = vunpack.c.l.b16 %v180
        %v656 = vunpack.c.l.b16 %v181
        %v657 = vunpack.c.h.b16 %v181
        %v658 = vunpack.c.l.b16 %v182
        %v659 = vunpack.c.h.b16 %v182
        %v660 = vunpack.c.l.b16 %v183
        %v661 = vunpack.c.h.b16 %v183
        %v662 = vunpack.c.l.b16 %v184
        %v663 = vunpack.c.h.b16 %v184
        %v664 = vunpack.c.l.b16 %v185
        %v665 = vunpack.c.l.b16 %v186
        %v666 = vunpack.c.h.b16 %v186
        %v667 = vunpack.c.l.b16 %v187
        %v668 = vunpack.c.h.b16 %v187
        %v669 = vunpack.c.l.b16 %v188
        %v670 = vunpack.c.h.b16 %v188
        %v671 = vunpack.c.l.b16 %v189
        %v672 = vunpack.c.h.b16 %v189
        %v673 = vunpack.c.l.b16 %v190
        %v674 = vunpack.c.l.b16 %v191
        %v675 = vunpack.c.h.b16 %v191
        %v676 = vunpack.c.l.b16 %v192
        %v677 = vunpack.c.h.b16 %v192
        %v678 = vunpack.c.l.b16 %v193
        %v679 = vunpack.c.h.b16 %v193
        %v680 = vunpack.c.l.b16 %v194
        %v681 = vunpack.c.h.b16 %v194
        %v682 = vunpack.c.l.b16 %v195
        %v683 = vunpack.c.l.b16 %v196
        %v684 = vunpack.c.h.b16 %v196
        %v685 = vunpack.c.l.b16 %v197
        %v686 = vunpack.c.h.b16 %v197
        %v687 = vunpack.c.l.b16 %v198
        %v688 = vunpack.c.h.b16 %v198
        %v689 = vunpack.c.l.b16 %v199
        %v690 = vunpack.c.h.b16 %v199
        %v691 = vunpack.c.l.b16 %v200
        %v692 = vunpack.c.l.b16 %v201
        %v693 = vunpack.c.h.b16 %v201
        %v694 = vunpack.c.l.b16 %v202
        %v695 = vunpack.c.h.b16 %v202
        %v696 = vunpack.c.l.b16 %v203
        %v697 = vunpack.c.h.b16 %v203
        %v698 = vunpack.c.l.b16 %v204
        %v699 = vunpack.c.h.b16 %v204
        %v700 = vunpack.c.l.b16 %v205
        %v701 = vunpack.c.l.b16 %v206
        %v702 = vunpack.c.h.b16 %v206
        %v703 = vunpack.c.l.b16 %v207
        %v704 = vunpack.c.h.b16 %v207
        %v705 = vunpack.c.l.b16 %v208
        %v706 = vunpack.c.h.b16 %v208
        %v707 = vunpack.c.l.b16 %v209
        %v708 = vunpack.c.h.b16 %v209
        %v709 = vunpack.c.l.b16 %v210
        %v710 = vunpack.c.l.b16 %v211
        %v711 = vunpack.c.h.b16 %v211
        %v712 = vunpack.c.l.b16 %v212
        %v713 = vunpack.c.h.b16 %v212
        %v714 = vunpack.c.l.b16 %v213
        %v715 = vunpack.c.h.b16 %v213
        %v716 = vunpack.c.l.b16 %v214
        %v717 = vunpack.c.h.b16 %v214
        %v718 = vunpack.c.l.b16 %v215
        %v719 = vunpack.c.l.b16 %v216
        %v720 = vunpack.c.h.b16 %v216
        %v721 = vunpack.c.l.b16 %v217
        %v722 = vunpack.c.h.b16 %v217
        %v723 = vunpack.c.l.b16 %v218
        %v724 = vunpack.c.h.b16 %v218
        %v725 = vunpack.c.l.b16 %v219
        %v726 = vunpack.c.h.b16 %v219
        %v727 = vunpack.c.l.b16 %v220
        %v728 = vunpack.c.l.b16 %v221
        %v729 = vunpack.c.h.b16 %v221
        %v730 = vunpack.c.l.b16 %v222
        %v731 = vunpack.c.h.b16 %v222
        %v732 = vunpack.c.l.b16 %v223
        %v733 = vunpack.c.h.b16 %v223
        %v734 = vunpack.c.l.b16 %v224
        %v735 = vunpack.c.h.b16 %v224
        %v736 = vunpack.c.l.b16 %v225
        %v737 = vunpack.c.l.b16 %v226
        %v738 = vunpack.c.h.b16 %v226
        %v739 = vunpack.c.l.b16 %v227
        %v740 = vunpack.c.h.b16 %v227
        %v741 = vunpack.c.l.b16 %v228
        %v742 = vunpack.c.h.b16 %v228
        %v743 = vunpack.c.l.b16 %v229
        %v744 = vunpack.c.h.b16 %v229
        %v745 = vunpack.c.l.b16 %v230
        %v746 = vunpack.c.l.b16 %v231
        %v747 = vunpack.c.h.b16 %v231
        %v748 = vunpack.c.l.b16 %v232
        %v749 = vunpack.c.h.b16 %v232
        %v750 = vunpack.c.l.b16 %v233
        %v751 = vunpack.c.h.b16 %v233
        %v752 = vunpack.c.l.b16 %v234
        %v753 = vunpack.c.h.b16 %v234
        %v754 = vunpack.c.l.b16 %v235
        %v755 = vunpack.c.l.b16 %v236
        %v756 = vunpack.c.h.b16 %v236
        %v757 = vunpack.c.l.b16 %v237
        %v758 = vunpack.c.h.b16 %v237
        %v759 = vunpack.c.l.b16 %v238
        %v760 = vunpack.c.h.b16 %v238
        %v761 = vunpack.c.l.b16 %v239
        %v762 = vunpack.c.h.b16 %v239
        %v763 = vunpack.c.l.b16 %v240
        %v764 = vunpack.c.l.b16 %v241
        %v765 = vunpack.c.h.b16 %v241
        %v766 = vunpack.c.l.b16 %v242
        %v767 = vunpack.c.h.b16 %v242
        %v768 = vunpack.c.l.b16 %v243
        %v769 = vunpack.c.h.b16 %v243
        %v770 = vunpack.c.l.b16 %v244
        %v771 = vunpack.c.h.b16 %v244
        %v772 = vunpack.c.l.b16 %v245
        %v773 = vunpack.c.l.b16 %v246
        %v774 = vunpack.c.h.b16 %v246
        %v775 = vunpack.c.l.b16 %v247
        %v776 = vunpack.c.h.b16 %v247
        %v777 = vunpack.c.l.b16 %v248
        %v778 = vunpack.c.h.b16 %v248
        %v779 = vunpack.c.l.b16 %v249
        %v780 = vunpack.c.h.b16 %v249
        %v781 = vunpack.c.l.b16 %v250
        %v782 = vunpack.c.l.b16 %v251
        %v783 = vunpack.c.h.b16 %v251
        %v784 = vunpack.c.l.b16 %v252
        %v785 = vunpack.c.h.b16 %v252
        %v786 = vunpack.c.l.b16 %v253
        %v787 = vunpack.c.h.b16 %v253
        %v788 = vunpack.c.l.b16 %v254
        %v789 = vunpack.c.h.b16 %v254
        %v790 = vunpack.c.l.b16 %v255
        %v791 = vunpack.c.l.b16 %v256
        %v792 = vunpack.c.h.b16 %v256
        %v793 = vunpack.c.l.b16 %v257
        %v794 = vunpack.c.h.b16 %v257
        %v795 = vunpack.c.l.b16 %v258
        %v796 = vunpack.c.h.b16 %v258
        %v797 = vunpack.c.l.b16 %v259
        %v798 = vunpack.c.h.b16 %v259
        %v799 = vunpack.c.l.b16 %v260
        %v800 = vunpack.c.l.b16 %v261
        %v801 = vunpack.c.h.b16 %v261
        %v802 = vunpack.c.l.b16 %v262
        %v803 = vunpack.c.h.b16 %v262
        %v804 = vunpack.c.l.b16 %v263
        %v805 = vunpack.c.h.b16 %v263
        %v806 = vunpack.c.l.b16 %v264
        %v807 = vunpack.c.h.b16 %v264
        %v808 = vunpack.c.l.b16 %v265
        %v809 = vunpack.c.l.b16 %v266
        %v810 = vunpack.c.h.b16 %v266
        %v811 = vunpack.c.l.b16 %v267
        %v812 = vunpack.c.h.b16 %v267
        %v813 = vunpack.c.l.b16 %v268
        %v814 = vunpack.c.h.b16 %v268
        %v815 = vunpack.c.l.b16 %v269
        %v816 = vunpack.c.h.b16 %v269
        %v817 = vunpack.c.l.b16 %v270
        %v818 = vunpack.c.l.b16 %v271
        %v819 = vunpack.c.h.b16 %v271
        %v820 = vunpack.c.l.b16 %v272
        %v821 = vunpack.c.h.b16 %v272
        %v822 = vunpack.c.l.b16 %v273
        %v823 = vunpack.c.h.b16 %v273
        %v824 = vunpack.c.l.b16 %v274
        %v825 = vunpack.c.h.b16 %v274
        %v826 = vunpack.c.l.b16 %v275
        %v827 = vunpack.c.l.b16 %v276
        %v828 = vunpack.c.h.b16 %v276
        %v829 = vunpack.c.l.b16 %v277
        %v830 = vunpack.c.h.b16 %v277
        %v831 = vunpack.c.l.b16 %v278
        %v832 = vunpack.c.h.b16 %v278
        %v833 = vunpack.c.l.b16 %v279
        %v834 = vunpack.c.h.b16 %v279
        %v835 = vunpack.c.l.b16 %v280
        %v836 = vunpack.c.l.b16 %v281
        %v837 = vunpack.c.h.b16 %v281
        %v838 = vunpack.c.l.b16 %v282
        %v839 = vunpack.c.h.b16 %v282
        %v840 = vunpack.c.l.b16 %v283
        %v841 = vunpack.c.h.b16 %v283
        %v842 = vunpack.c.l.b16 %v284
        %v843 = vunpack.c.h.b16 %v284
        %v844 = vunpack.c.l.b16 %v285
        %v845 = vunpack.c.l.b16 %v286
        %v846 = vunpack.c.h.b16 %v286
        %v847 = vunpack.c.l.b16 %v287
        %v848 = vunpack.c.h.b16 %v287
        %v849 = vunpack.c.l.b16 %v288
        %v850 = vunpack.c.h.b16 %v288
        %v851 = vunpack.c.l.b16 %v289
        %v852 = vunpack.c.h.b16 %v289
        %v853 = vunpack.c.l.b16 %v290
        %v854 = vunpack.c.l.b16 %v291
        %v855 = vunpack.c.h.b16 %v291
        %v856 = vunpack.c.l.b16 %v292
        %v857 = vunpack.c.h.b16 %v292
        %v858 = vunpack.c.l.b16 %v293
        %v859 = vunpack.c.h.b16 %v293
        %v860 = vunpack.c.l.b16 %v294
        %v861 = vunpack.c.h.b16 %v294
        %v862 = vunpack.c.l.b16 %v295
        %v863 = vunpack.c.l.b16 %v296
        %v864 = vunpack.c.h.b16 %v296
        %v865 = vunpack.c.l.b16 %v297
        %v866 = vunpack.c.h.b16 %v297
        %v867 = vunpack.c.l.b16 %v298
        %v868 = vunpack.c.h.b16 %v298
        %v869 = vunpack.c.l.b16 %v299
        %v870 = vunpack.c.h.b16 %v299
        %v871 = vunpack.c.l.b16 %v300
        %v872 = vunpack.c.l.b16 %v301
        %v873 = vunpack.c.h.b16 %v301
        %v874 = vunpack.c.l.b16 %v302
        %v875 = vunpack.c.h.b16 %v302
        %v876 = vunpack.c.l.b16 %v303
        %v877 = vunpack.c.h.b16 %v303
        %v878 = vunpack.c.l.b16 %v304
        %v879 = vunpack.c.h.b16 %v304
        %v880 = vunpack.c.l.b16 %v305
        %v881 = vunpack.c.l.b16 %v306
        %v882 = vunpack.c.h.b16 %v306
        %v883 = vunpack.c.l.b16 %v307
        %v884 = vunpack.c.h.b16 %v307
        %v885 = vunpack.c.l.b16 %v308
        %v886 = vunpack.c.h.b16 %v308
        %v887 = vunpack.c.l.b16 %v309
        %v888 = vunpack.c.h.b16 %v309
        %v889 = vunpack.c.l.b16 %v310
        %v890 = vunpack.c.l.b16 %v311
        %v891 = vunpack.c.h.b16 %v311
        %v892 = vunpack.c.l.b16 %v312
        %v893 = vunpack.c.h.b16 %v312
        %v894 = vunpack.c.l.b16 %v313
        %v895 = vunpack.c.h.b16 %v313
        %v896 = vunpack.c.l.b16 %v314
        %v897 = vunpack.c.h.b16 %v314
        %v898 = vunpack.c.l.b16 %v315
        %v899 = vunpack.c.l.b16 %v316
        %v900 = vunpack.c.h.b16 %v316
        %v901 = vunpack.c.l.b16 %v317
        %v902 = vunpack.c.h.b16 %v317
        %v903 = vunpack.c.l.b16 %v318
        %v904 = vunpack.c.h.b16 %v318
        %v905 = vunpack.c.l.b16 %v319
        %v906 = vunpack.c.h.b16 %v319
        %v907 = vunpack.c.l.b16 %v320
        %v908 = vunpack.c.l.b16 %v321
        %v909 = vunpack.c.h.b16 %v321
        %v910 = vunpack.c.l.b16 %v322
        %v911 = vunpack.c.h.b16 %v322
        %v912 = vunpack.c.l.b16 %v323
        %v913 = vunpack.c.h.b16 %v323
        %v914 = vunpack.c.l.b16 %v324
        %v915 = vunpack.c.h.b16 %v324
        %v916 = vunpack.c.l.b16 %v325
        %v917 = vunpack.c.l.b16 %v326
        %v918 = vunpack.c.h.b16 %v326
        %v919 = vunpack.c.l.b16 %v327
        %v920 = vunpack.c.h.b16 %v327
        %v921 = vunpack.c.l.b16 %v328
        %v922 = vunpack.c.h.b16 %v328
        %v923 = vunpack.c.l.b16 %v329
        %v924 = vunpack.c.h.b16 %v329
        %v925 = vunpack.c.l.b16 %v330
        %v926 = vunpack.c.l.b16 %v331
        %v927 = vunpack.c.h.b16 %v331
        %v928 = vunpack.c.l.b16 %v332
        %v929 = vunpack.c.h.b16 %v332
        %v930 = vunpack.c.l.b16 %v333
        %v931 = vunpack.c.h.b16 %v333
        %v932 = vunpack.c.l.b16 %v334
        %v933 = vunpack.c.h.b16 %v334
        %v934 = vunpack.c.l.b16 %v335
        %v935 = vpack.c.b16 %v656, %v647
        %v936 = vpack.c.b16 %v657, %v648
        %v937 = vpack.c.b16 %v658, %v649
        %v938 = vpack.c.b16 %v659, %v650
        %v939 = vpack.c.b16 %v660, %v651
        %v940 = vpack.c.b16 %v661, %v652
        %v941 = vpack.c.b16 %v662, %v653
        %v942 = vpack.c.b16 %v663, %v654
        %v943 = vpack.c.b16 %v664, %v655
        %v944 = vpack.c.b16 %v674, %v665
        %v945 = vpack.c.b16 %v675, %v666
        %v946 = vpack.c.b16 %v676, %v667
        %v947 = vpack.c.b16 %v677, %v668
        %v948 = vpack.c.b16 %v678, %v669
        %v949 = vpack.c.b16 %v679, %v670
        %v950 = vpack.c.b16 %v680, %v671
        %v951 = vpack.c.b16 %v681, %v672
        %v952 = vpack.c.b16 %v682, %v673
        %v953 = vpack.c.b16 %v692, %v683
        %v954 = vpack.c.b16 %v693, %v684
        %v955 = vpack.c.b16 %v694, %v685
        %v956 = vpack.c.b16 %v695, %v686
        %v957 = vpack.c.b16 %v696, %v687
        %v958 = vpack.c.b16 %v697, %v688
        %v959 = vpack.c.b16 %v698, %v689
        %v960 = vpack.c.b16 %v699, %v690
        %v961 = vpack.c.b16 %v700, %v691
        %v962 = vpack.c.b16 %v710, %v701
        %v963 = vpack.c.b16 %v711, %v702
        %v964 = vpack.c.b16 %v712, %v703
        %v965 = vpack.c.b16 %v713, %v704
        %v966 = vpack.c.b16 %v714, %v705
        %v967 = vpack.c.b16 %v715, %v706
        %v968 = vpack.c.b16 %v716, %v707
        %v969 = vpack.c.b16 %v717, %v708
        %v970 = vpack.c.b16 %v718, %v709
        %v971 = vpack.c.b16 %v728, %v719
        %v972 = vpack.c.b16 %v729, %v720
        %v973 = vpack.c.b16 %v730, %v721
        %v974 = vpack.c.b16 %v731, %v722
        %v975 = vpack.c.b16 %v732, %v723
        %v976 = vpack.c.b16 %v733, %v724
        %v977 = vpack.c.b16 %v734, %v725
        %v978 = vpack.c.b16 %v735, %v726
        %v979 = vpack.c.b16 %v736, %v727
        %v980 = vpack.c.b16 %v746, %v737
        %v981 = vpack.c.b16 %v747, %v738
        %v982 = vpack.c.b16 %v748, %v739
        %v983 = vpack.c.b16 %v749, %v740
        %v984 = vpack.c.b16 %v750, %v741
        %v985 = vpack.c.b16 %v751, %v742
        %v986 = vpack.c.b16 %v752, %v743
        %v987 = vpack.c.b16 %v753, %v744
        %v988 = vpack.c.b16 %v754, %v745
        %v989 = vpack.c.b16 %v764, %v755
        %v990 = vpack.c.b16 %v765, %v756
        %v991 = vpack.c.b16 %v766, %v757
        %v992 = vpack.c.b16 %v767, %v758
        %v993 = vpack.c.b16 %v768, %v759
        %v994 = vpack.c.b16 %v769, %v760
        %v995 = vpack.c.b16 %v770, %v761
        %v996 = vpack.c.b16 %v771, %v762
        %v997 = vpack.c.b16 %v772, %v763
        %v998 = vpack.c.b16 %v782, %v773
        %v999 = vpack.c.b16 %v783, %v774
        %v1000 = vpack.c.b16 %v784, %v775
        %v1001 = vpack.c.b16 %v785, %v776
        %v1002 = vpack.c.b16 %v786, %v777
        %v1003 = vpack.c.b16 %v787, %v778
        %v1004 = vpack.c.b16 %v788, %v779
        %v1005 = vpack.c.b16 %v789, %v780
        %v1006 = vpack.c.b16 %v790, %v781
        %v1007 = vpack.c.b16 %v800, %v791
        %v1008 = vpack.c.b16 %v801, %v792
        %v1009 = vpack.c.b16 %v802, %v793
        %v1010 = vpack.c.b16 %v803, %v794
        %v1011 = vpack.c.b16 %v804, %v795
        %v1012 = vpack.c.b16 %v805, %v796
        %v1013 = vpack.c.b16 %v806, %v797
        %v1014 = vpack.c.b16 %v807, %v798
        %v1015 = vpack.c.b16 %v808, %v799
        %v1016 = vpack.c.b16 %v818, %v809
        %v1017 = vpack.c.b16 %v819, %v810
        %v1018 = vpack.c.b16 %v820, %v811
        %v1019 = vpack.c.b16 %v821, %v812
        %v1020 = vpack.c.b16 %v822, %v813
        %v1021 = vpack.c.b16 %v823, %v814
        %v1022 = vpack.c.b16 %v824, %v815
        %v1023 = vpack.c.b16 %v825, %v816
        %v1024 = vpack.c.b16 %v826, %v817
        %v1025 = vpack.c.b16 %v836, %v827
        %v1026 = vpack.c.b16 %v837, %v828
        %v1027 = vpack.c.b16 %v838, %v829
        %v1028 = vpack.c.b16 %v839, %v830
        %v1029 = vpack.c.b16 %v840, %v831
        %v1030 = vpack.c.b16 %v841, %v832
        %v1031 = vpack.c.b16 %v842, %v833
        %v1032 = vpack.c.b16 %v843, %v834
        %v1033 = vpack.c.b16 %v844, %v835
        %v1034 = vpack.c.b16 %v854, %v845
        %v1035 = vpack.c.b16 %v855, %v846
        %v1036 = vpack.c.b16 %v856, %v847
        %v1037 = vpack.c.b16 %v857, %v848
        %v1038 = vpack.c.b16 %v858, %v849
        %v1039 = vpack.c.b16 %v859, %v850
        %v1040 = vpack.c.b16 %v860, %v851
        %v1041 = vpack.c.b16 %v861, %v852
        %v1042 = vpack.c.b16 %v862, %v853
        %v1043 = vpack.c.b16 %v872, %v863
        %v1044 = vpack.c.b16 %v873, %v864
        %v1045 = vpack.c.b16 %v874, %v865
        %v1046 = vpack.c.b16 %v875, %v866
        %v1047 = vpack.c.b16 %v876, %v867
        %v1048 = vpack.c.b16 %v877, %v868
        %v1049 = vpack.c.b16 %v878, %v869
        %v1050 = vpack.c.b16 %v879, %v870
        %v1051 = vpack.c.b16 %v880, %v871
        %v1052 = vpack.c.b16 %v890, %v881
        %v1053 = vpack.c.b16 %v891, %v882
        %v1054 = vpack.c.b16 %v892, %v883
        %v1055 = vpack.c.b16 %v893, %v884
        %v1056 = vpack.c.b16 %v894, %v885
        %v1057 = vpack.c.b16 %v895, %v886
        %v1058 = vpack.c.b16 %v896, %v887
        %v1059 = vpack.c.b16 %v897, %v888
        %v1060 = vpack.c.b16 %v898, %v889
        %v1061 = vpack.c.b16 %v908, %v899
        %v1062 = vpack.c.b16 %v909, %v900
        %v1063 = vpack.c.b16 %v910, %v901
        %v1064 = vpack.c.b16 %v911, %v902
        %v1065 = vpack.c.b16 %v912, %v903
        %v1066 = vpack.c.b16 %v913, %v904
        %v1067 = vpack.c.b16 %v914, %v905
        %v1068 = vpack.c.b16 %v915, %v906
        %v1069 = vpack.c.b16 %v916, %v907
        %v1070 = vpack.c.b16 %v926, %v917
        %v1071 = vpack.c.b16 %v927, %v918
        %v1072 = vpack.c.b16 %v928, %v919
        %v1073 = vpack.c.b16 %v929, %v920
        %v1074 = vpack.c.b16 %v930, %v921
        %v1075 = vpack.c.b16 %v931, %v922
        %v1076 = vpack.c.b16 %v932, %v923
        %v1077 = vpack.c.b16 %v933, %v924
        %v1078 = vpack.c.b16 %v934, %v925
        %v1367 = vunpack.c.l.b16 %v336
        %v1368 = vunpack.c.l.b16 %v337
        %v1369 = vunpack.c.l.b16 %v338
        %v1370 = vunpack.c.l.b16 %v339
        %v1371 = vunpack.c.l.b16 %v340
        %v1372 = vunpack.c.l.b16 %v341
        %v1373 = vunpack.c.l.b16 %v342
        %v1374 = vunpack.c.l.b16 %v343
        %v1375 = vunpack.c.l.b16 %v344
        %v1376 = vunpack.c.l.b16 %v345
        %v1377 = vunpack.c.l.b16 %v346
        %v1378 = vunpack.c.l.b16 %v347
        %v1379 = vunpack.c.l.b16 %v348
        %v1380 = vunpack.c.l.b16 %v349
        %v1381 = vunpack.c.l.b16 %v350
        %v1382 = vunpack.c.l.b16 %v351
        %v1383 = vunpack.c.l.b16 %v352
        %v1384 = vunpack.c.l.b16 %v353
        %v1385 = vunpack.c.l.b16 %v354
        %v1386 = vunpack.c.l.b16 %v355
        %v1387 = vunpack.c.l.b16 %v356
        %v1388 = vunpack.c.l.b16 %v357
        %v1389 = vunpack.c.l.b16 %v358
        %v1390 = vunpack.c.l.b16 %v359
        %v1391 = vunpack.c.l.b16 %v360
        %v1392 = vunpack.c.l.b16 %v361
        %v1393 = vunpack.c.l.b16 %v362
        %v1394 = vunpack.c.l.b16 %v363
        %v1395 = vunpack.c.l.b16 %v364
        %v1396 = vunpack.c.l.b16 %v365
        %v1397 = vunpack.c.l.b16 %v366
        %v1398 = vunpack.c.l.b16 %v367
        %v1399 = vunpack.c.l.b16 %v368
        %v1400 = vunpack.c.l.b16 %v369
        %v1401 = vunpack.c.l.b16 %v370
        %v1402 = vunpack.c.l.b16 %v371
        %v1403 = vunpack.c.l.b16 %v372
        %v1404 = vunpack.c.l.b16 %v373
        %v1405 = vunpack.c.l.b16 %v374
        %v1406 = vunpack.c.l.b16 %v375
        %v1407 = vunpack.c.l.b16 %v376
        %v1408 = vunpack.c.l.b16 %v377
        %v1409 = vunpack.c.l.b16 %v378
        %v1410 = vunpack.c.l.b16 %v379
        %v1411 = vunpack.c.l.b16 %v380
        %v1412 = vunpack.c.l.b16 %v381
        %v1413 = vunpack.c.l.b16 %v382
        %v1414 = vunpack.c.l.b16 %v383
        %v1415 = vunpack.c.l.b16 %v384
        %v1416 = vunpack.c.l.b16 %v385
        %v1417 = vunpack.c.l.b16 %v386
        %v1418 = vunpack.c.l.b16 %v387
        %v1419 = vunpack.c.l.b16 %v388
        %v1420 = vunpack.c.l.b16 %v389
        %v1421 = vunpack.c.l.b16 %v390
        %v1422 = vunpack.c.l.b16 %v391
        %v1423 = vunpack.c.l.b16 %v392
        %v1424 = vunpack.c.l.b16 %v393
        %v1425 = vunpack.c.l.b16 %v394
        %v1426 = vunpack.c.l.b16 %v395
        %v1427 = vunpack.c.l.b16 %v396
        %v1428 = vunpack.c.l.b16 %v397
        %v1429 = vunpack.c.l.b16 %v398
        %v1430 = vunpack.c.l.b16 %v399
        %v1431 = vunpack.c.l.b16 %v400
        %v1432 = vunpack.c.l.b16 %v401
        %v1433 = vunpack.c.l.b16 %v402
        %v1434 = vunpack.c.l.b16 %v403
        %v1435 = vunpack.c.l.b16 %v404
        %v1436 = vunpack.c.l.b16 %v405
        %v1437 = vunpack.c.l.b16 %v406
        %v1438 = vunpack.c.l.b16 %v407
        %v1439 = vunpack.c.l.b16 %v408
        %v1440 = vunpack.c.l.b16 %v409
        %v1441 = vunpack.c.l.b16 %v410
        %v1442 = vunpack.c.l.b16 %v411
        %v1443 = vunpack.c.l.b16 %v412
        %v1444 = vunpack.c.l.b16 %v413
        %v1445 = vunpack.c.l.b16 %v414
        %v1446 = vunpack.c.l.b16 %v415
        %v1447 = vunpack.c.l.b16 %v416
        %v1448 = vunpack.c.l.b16 %v417
        %v1449 = vunpack.c.l.b16 %v418
        %v1450 = vunpack.c.l.b16 %v419
        %v1451 = vunpack.c.l.b16 %v420
        %v1452 = vunpack.c.l.b16 %v421
        %v1453 = vunpack.c.l.b16 %v422
        %v1454 = vunpack.c.l.b16 %v423
        %v1455 = vunpack.c.l.b16 %v424
        %v1456 = vunpack.c.l.b16 %v425
        %v1457 = vunpack.c.l.b16 %v426
        %v1458 = vunpack.c.l.b16 %v427
        %v1459 = vunpack.c.l.b16 %v428
        %v1460 = vunpack.c.l.b16 %v429
        %v1461 = vunpack.c.l.b16 %v430
        %v1462 = vunpack.c.l.b16 %v431
        %v1463 = vunpack.c.l.b16 %v432
        %v1464 = vunpack.c.l.b16 %v433
        %v1465 = vunpack.c.l.b16 %v434
        %v1466 = vunpack.c.l.b16 %v435
        %v1467 = vunpack.c.l.b16 %v436
        %v1468 = vunpack.c.l.b16 %v437
        %v1469 = vunpack.c.l.b16 %v438
        %v1470 = vunpack.c.l.b16 %v439
        %v1471 = vunpack.c.l.b16 %v440
        %v1472 = vunpack.c.l.b16 %v441
        %v1473 = vunpack.c.l.b16 %v442
        %v1474 = vunpack.c.l.b16 %v443
        %v1475 = vunpack.c.l.b16 %v444
        %v1476 = vunpack.c.l.b16 %v445
        %v1477 = vunpack.c.l.b16 %v446
        %v1478 = vunpack.c.l.b16 %v447
        %v1479 = vunpack.c.l.b16 %v448
        %v1480 = vunpack.c.l.b16 %v449
        %v1481 = vunpack.c.l.b16 %v450
        %v1482 = vunpack.c.l.b16 %v451
        %v1483 = vunpack.c.l.b16 %v452
        %v1484 = vunpack.c.l.b16 %v453
        %v1485 = vunpack.c.l.b16 %v454
        %v1486 = vunpack.c.l.b16 %v455
        %v1487 = vunpack.c.l.b16 %v456
        %v1488 = vunpack.c.l.b16 %v457
        %v1489 = vunpack.c.l.b16 %v458
        %v1490 = vunpack.c.l.b16 %v459
        %v1491 = vunpack.c.l.b16 %v460
        %v1492 = vunpack.c.l.b16 %v461
        %v1493 = vunpack.c.l.b16 %v462
        %v1494 = vunpack.c.l.b16 %v463
        %v1495 = vunpack.c.l.b16 %v464
        %v1496 = vunpack.c.l.b16 %v465
        %v1497 = vunpack.c.l.b16 %v466
        %v1498 = vunpack.c.l.b16 %v467
        %v1499 = vunpack.c.l.b16 %v468
        %v1500 = vunpack.c.l.b16 %v469
        %v1501 = vunpack.c.l.b16 %v470
        %v1502 = vunpack.c.l.b16 %v471
        %v1503 = vunpack.c.l.b16 %v472
        %v1504 = vunpack.c.l.b16 %v473
        %v1505 = vunpack.c.l.b16 %v474
        %v1506 = vunpack.c.l.b16 %v475
        %v1507 = vunpack.c.l.b16 %v476
        %v1508 = vunpack.c.l.b16 %v477
        %v1509 = vunpack.c.l.b16 %v478
        %v1510 = vunpack.c.l.b16 %v479
        %v1511 = vpack.c.b16 %v1368, %v1367
        %v1512 = vpack.c.b16 %v1370, %v1369
        %v1513 = vpack.c.b16 %v1372, %v1371
        %v1514 = vpack.c.b16 %v1374, %v1373
        %v1515 = vpack.c.b16 %v1376, %v1375
        %v1516 = vpack.c.b16 %v1378, %v1377
        %v1517 = vpack.c.b16 %v1380, %v1379
        %v1518 = vpack.c.b16 %v1382, %v1381
        %v1519 = vpack.c.b16 %v1384, %v1383
        %v1520 = vpack.c.b16 %v1386, %v1385
        %v1521 = vpack.c.b16 %v1388, %v1387
        %v1522 = vpack.c.b16 %v1390, %v1389
        %v1523 = vpack.c.b16 %v1392, %v1391
        %v1524 = vpack.c.b16 %v1394, %v1393
        %v1525 = vpack.c.b16 %v1396, %v1395
        %v1526 = vpack.c.b16 %v1398, %v1397
        %v1527 = vpack.c.b16 %v1400, %v1399
        %v1528 = vpack.c.b16 %v1402, %v1401
        %v1529 = vpack.c.b16 %v1404, %v1403
        %v1530 = vpack.c.b16 %v1406, %v1405
        %v1531 = vpack.c.b16 %v1408, %v1407
        %v1532 = vpack.c.b16 %v1410, %v1409
        %v1533 = vpack.c.b16 %v1412, %v1411
        %v1534 = vpack.c.b16 %v1414, %v1413
        %v1535 = vpack.c.b16 %v1416, %v1415
        %v1536 = vpack.c.b16 %v1418, %v1417
        %v1537 = vpack.c.b16 %v1420, %v1419
        %v1538 = vpack.c.b16 %v1422, %v1421
        %v1539 = vpack.c.b16 %v1424, %v1423
        %v1540 = vpack.c.b16 %v1426, %v1425
        %v1541 = vpack.c.b16 %v1428, %v1427
        %v1542 = vpack.c.b16 %v1430, %v1429
        %v1543 = vpack.c.b16 %v1432, %v1431
        %v1544 = vpack.c.b16 %v1434, %v1433
        %v1545 = vpack.c.b16 %v1436, %v1435
        %v1546 = vpack.c.b16 %v1438, %v1437
        %v1547 = vpack.c.b16 %v1440, %v1439
        %v1548 = vpack.c.b16 %v1442, %v1441
        %v1549 = vpack.c.b16 %v1444, %v1443
        %v1550 = vpack.c.b16 %v1446, %v1445
        %v1551 = vpack.c.b16 %v1448, %v1447
        %v1552 = vpack.c.b16 %v1450, %v1449
        %v1553 = vpack.c.b16 %v1452, %v1451
        %v1554 = vpack.c.b16 %v1454, %v1453
        %v1555 = vpack.c.b16 %v1456, %v1455
        %v1556 = vpack.c.b16 %v1458, %v1457
        %v1557 = vpack.c.b16 %v1460, %v1459
        %v1558 = vpack.c.b16 %v1462, %v1461
        %v1559 = vpack.c.b16 %v1464, %v1463
        %v1560 = vpack.c.b16 %v1466, %v1465
        %v1561 = vpack.c.b16 %v1468, %v1467
        %v1562 = vpack.c.b16 %v1470, %v1469
        %v1563 = vpack.c.b16 %v1472, %v1471
        %v1564 = vpack.c.b16 %v1474, %v1473
        %v1565 = vpack.c.b16 %v1476, %v1475
        %v1566 = vpack.c.b16 %v1478, %v1477
        %v1567 = vpack.c.b16 %v1480, %v1479
        %v1568 = vpack.c.b16 %v1482, %v1481
        %v1569 = vpack.c.b16 %v1484, %v1483
        %v1570 = vpack.c.b16 %v1486, %v1485
        %v1571 = vpack.c.b16 %v1488, %v1487
        %v1572 = vpack.c.b16 %v1490, %v1489
        %v1573 = vpack.c.b16 %v1492, %v1491
        %v1574 = vpack.c.b16 %v1494, %v1493
        %v1575 = vpack.c.b16 %v1496, %v1495
        %v1576 = vpack.c.b16 %v1498, %v1497
        %v1577 = vpack.c.b16 %v1500, %v1499
        %v1578 = vpack.c.b16 %v1502, %v1501
        %v1579 = vpack.c.b16 %v1504, %v1503
        %v1580 = vpack.c.b16 %v1506, %v1505
        %v1581 = vpack.c.b16 %v1508, %v1507
        %v1582 = vpack.c.b16 %v1510, %v1509
        %1655 = vmatprep.subr.bf16.mxu0 0
        %1656 = vmatpush1.bf16.msra.mxu0 %v1518
        %1657 = vmatprep.subr.bf16.mxu0 0
        %1658 = vmatpush1.bf16.msra.mxu0 %v1517
        %1659 = vmatprep.subr.bf16.mxu0 0
        %1660 = vmatpush1.bf16.msra.mxu0 %v1516
        %1661 = vmatprep.subr.bf16.mxu0 0
        %1662 = vmatpush1.bf16.msra.mxu0 %v1515
        %1663 = vmatprep.subr.bf16.mxu0 0
        %1664 = vmatpush1.bf16.msra.mxu0 %v1514
        %1665 = vmatprep.subr.bf16.mxu0 0
        %1666 = vmatpush1.bf16.msra.mxu0 %v1513
        %1667 = vmatprep.subr.bf16.mxu0 0
        %1668 = vmatpush1.bf16.msra.mxu0 %v1512
        %1669 = vmatprep.subr.bf16.mxu0 0
        %1670 = vmatpush1.bf16.msra.mxu0 %v1511
        %1671 = vmatprep.subr.bf16.mxu0 0
        %1672 = vmatpush2.bf16.msra.mxu0 %v1526
        %1673 = vmatprep.subr.bf16.mxu0 0
        %1674 = vmatpush2.bf16.msra.mxu0 %v1525
        %1675 = vmatprep.subr.bf16.mxu0 0
        %1676 = vmatpush2.bf16.msra.mxu0 %v1524
        %1677 = vmatprep.subr.bf16.mxu0 0
        %1678 = vmatpush2.bf16.msra.mxu0 %v1523
        %1679 = vmatprep.subr.bf16.mxu0 0
        %1680 = vmatpush2.bf16.msra.mxu0 %v1522
        %1681 = vmatprep.subr.bf16.mxu0 0
        %1682 = vmatpush2.bf16.msra.mxu0 %v1521
        %1683 = vmatprep.subr.bf16.mxu0 0
        %1684 = vmatpush2.bf16.msra.mxu0 %v1520
        %1685 = vmatprep.subr.bf16.mxu0 0
        %1686 = vmatpush2.bf16.msra.mxu0 %v1519
        %1687 = vmatprep.mubr.bf16.mxu0 %v936
        %1688 = vmatmul.mubr.bf16.gmra.mxu0 %v935
        %v1689 = vpop.f32.mrf.mxu0
        %v1690 = vadd.f32 %v485, %v1689
        %v1691 = vpop.f32.mrf.mxu0
        %v1692 = vpop.f32.mrf.mxu0
        %v1693 = vadd.f32 %v485, %v1692
        %v1694 = vpop.f32.mrf.mxu0
        %1695 = vmatprep.mubr.bf16.mxu0 %v945
        %1696 = vmatmul.mubr.bf16.gmra.mxu0 %v944
        %v1697 = vpop.f32.mrf.mxu0
        %v1698 = vadd.f32 %v485, %v1697
        %v1699 = vpop.f32.mrf.mxu0
        %v1700 = vpop.f32.mrf.mxu0
        %v1701 = vadd.f32 %v485, %v1700
        %v1702 = vpop.f32.mrf.mxu0
        %1703 = vmatprep.mubr.bf16.mxu0 %v954
        %1704 = vmatmul.mubr.bf16.gmra.mxu0 %v953
        %v1705 = vpop.f32.mrf.mxu0
        %v1706 = vadd.f32 %v485, %v1705
        %v1707 = vpop.f32.mrf.mxu0
        %v1708 = vpop.f32.mrf.mxu0
        %v1709 = vadd.f32 %v485, %v1708
        %v1710 = vpop.f32.mrf.mxu0
        %1711 = vmatprep.mubr.bf16.mxu0 %v963
        %1712 = vmatmul.mubr.bf16.gmra.mxu0 %v962
        %v1713 = vpop.f32.mrf.mxu0
        %v1714 = vadd.f32 %v485, %v1713
        %v1715 = vpop.f32.mrf.mxu0
        %v1716 = vpop.f32.mrf.mxu0
        %v1717 = vadd.f32 %v485, %v1716
        %v1718 = vpop.f32.mrf.mxu0
        %1719 = vmatprep.mubr.bf16.mxu0 %v972
        %1720 = vmatmul.mubr.bf16.gmra.mxu0 %v971
        %v1721 = vpop.f32.mrf.mxu0
        %v1722 = vadd.f32 %v485, %v1721
        %v1723 = vpop.f32.mrf.mxu0
        %v1724 = vpop.f32.mrf.mxu0
        %v1725 = vadd.f32 %v485, %v1724
        %v1726 = vpop.f32.mrf.mxu0
        %1727 = vmatprep.mubr.bf16.mxu0 %v981
        %1728 = vmatmul.mubr.bf16.gmra.mxu0 %v980
        %v1729 = vpop.f32.mrf.mxu0
        %v1730 = vadd.f32 %v485, %v1729
        %v1731 = vpop.f32.mrf.mxu0
        %v1732 = vpop.f32.mrf.mxu0
        %v1733 = vadd.f32 %v485, %v1732
        %v1734 = vpop.f32.mrf.mxu0
        %1735 = vmatprep.mubr.bf16.mxu0 %v990
        %1736 = vmatmul.mubr.bf16.gmra.mxu0 %v989
        %v1737 = vpop.f32.mrf.mxu0
        %v1738 = vadd.f32 %v485, %v1737
        %v1739 = vpop.f32.mrf.mxu0
        %v1740 = vpop.f32.mrf.mxu0
        %v1741 = vadd.f32 %v485, %v1740
        %v1742 = vpop.f32.mrf.mxu0
        %1743 = vmatprep.mubr.bf16.mxu0 %v999
        %1744 = vmatmul.mubr.bf16.gmra.mxu0 %v998
        %v1745 = vpop.f32.mrf.mxu0
        %v1746 = vadd.f32 %v485, %v1745
        %v1747 = vpop.f32.mrf.mxu0
        %v1748 = vpop.f32.mrf.mxu0
        %v1749 = vadd.f32 %v485, %v1748
        %v1750 = vpop.f32.mrf.mxu0
        %1751 = vmatprep.mubr.bf16.mxu0 %v1008
        %1752 = vmatmul.mubr.bf16.gmra.mxu0 %v1007
        %v1753 = vpop.f32.mrf.mxu0
        %v1754 = vadd.f32 %v485, %v1753
        %v1755 = vpop.f32.mrf.mxu0
        %v1756 = vpop.f32.mrf.mxu0
        %v1757 = vadd.f32 %v485, %v1756
        %v1758 = vpop.f32.mrf.mxu0
        %1759 = vmatprep.mubr.bf16.mxu0 %v1017
        %1760 = vmatmul.mubr.bf16.gmra.mxu0 %v1016
        %v1761 = vpop.f32.mrf.mxu0
        %v1762 = vadd.f32 %v485, %v1761
        %v1763 = vpop.f32.mrf.mxu0
        %v1764 = vpop.f32.mrf.mxu0
        %v1765 = vadd.f32 %v485, %v1764
        %v1766 = vpop.f32.mrf.mxu0
        %1767 = vmatprep.mubr.bf16.mxu0 %v1026
        %1768 = vmatmul.mubr.bf16.gmra.mxu0 %v1025
        %v1769 = vpop.f32.mrf.mxu0
        %v1770 = vadd.f32 %v485, %v1769
        %v1771 = vpop.f32.mrf.mxu0
        %v1772 = vpop.f32.mrf.mxu0
        %v1773 = vadd.f32 %v485, %v1772
        %v1774 = vpop.f32.mrf.mxu0
        %1775 = vmatprep.mubr.bf16.mxu0 %v1035
        %1776 = vmatmul.mubr.bf16.gmra.mxu0 %v1034
        %v1777 = vpop.f32.mrf.mxu0
        %v1778 = vadd.f32 %v485, %v1777
        %v1779 = vpop.f32.mrf.mxu0
        %v1780 = vpop.f32.mrf.mxu0
        %v1781 = vadd.f32 %v485, %v1780
        %v1782 = vpop.f32.mrf.mxu0
        %1783 = vmatprep.mubr.bf16.mxu0 %v1044
        %1784 = vmatmul.mubr.bf16.gmra.mxu0 %v1043
        %v1785 = vpop.f32.mrf.mxu0
        %v1786 = vadd.f32 %v485, %v1785
        %v1787 = vpop.f32.mrf.mxu0
        %v1788 = vpop.f32.mrf.mxu0
        %v1789 = vadd.f32 %v485, %v1788
        %v1790 = vpop.f32.mrf.mxu0
        %1791 = vmatprep.mubr.bf16.mxu0 %v1053
        %1792 = vmatmul.mubr.bf16.gmra.mxu0 %v1052
        %v1793 = vpop.f32.mrf.mxu0
        %v1794 = vadd.f32 %v485, %v1793
        %v1795 = vpop.f32.mrf.mxu0
        %v1796 = vpop.f32.mrf.mxu0
        %v1797 = vadd.f32 %v485, %v1796
        %v1798 = vpop.f32.mrf.mxu0
        %1799 = vmatprep.mubr.bf16.mxu0 %v1062
        %1800 = vmatmul.mubr.bf16.gmra.mxu0 %v1061
        %v1801 = vpop.f32.mrf.mxu0
        %v1802 = vadd.f32 %v485, %v1801
        %v1803 = vpop.f32.mrf.mxu0
        %v1804 = vpop.f32.mrf.mxu0
        %v1805 = vadd.f32 %v485, %v1804
        %v1806 = vpop.f32.mrf.mxu0
        %1807 = vmatprep.mubr.bf16.mxu0 %v1071
        %1808 = vmatmul.mubr.bf16.gmra.mxu0 %v1070
        %v1809 = vpop.f32.mrf.mxu0
        %v1810 = vadd.f32 %v485, %v1809
        %v1811 = vpop.f32.mrf.mxu0
        %v1812 = vpop.f32.mrf.mxu0
        %v1813 = vadd.f32 %v485, %v1812
        %v1814 = vpop.f32.mrf.mxu0
        %1815 = vdwg.mxu0
        %1816 = vmatprep.subr.bf16.mxu0 0
        %1817 = vmatpush1.bf16.msra.mxu0 %v1534
        %1818 = vmatprep.subr.bf16.mxu0 0
        %1819 = vmatpush1.bf16.msra.mxu0 %v1533
        %1820 = vmatprep.subr.bf16.mxu0 0
        %1821 = vmatpush1.bf16.msra.mxu0 %v1532
        %1822 = vmatprep.subr.bf16.mxu0 0
        %1823 = vmatpush1.bf16.msra.mxu0 %v1531
        %1824 = vmatprep.subr.bf16.mxu0 0
        %1825 = vmatpush1.bf16.msra.mxu0 %v1530
        %1826 = vmatprep.subr.bf16.mxu0 0
        %1827 = vmatpush1.bf16.msra.mxu0 %v1529
        %1828 = vmatprep.subr.bf16.mxu0 0
        %1829 = vmatpush1.bf16.msra.mxu0 %v1528
        %1830 = vmatprep.subr.bf16.mxu0 0
        %1831 = vmatpush1.bf16.msra.mxu0 %v1527
        %1832 = vmatprep.subr.bf16.mxu0 0
        %1833 = vmatpush2.bf16.msra.mxu0 %v1542
        %1834 = vmatprep.subr.bf16.mxu0 0
        %1835 = vmatpush2.bf16.msra.mxu0 %v1541
        %1836 = vmatprep.subr.bf16.mxu0 0
        %1837 = vmatpush2.bf16.msra.mxu0 %v1540
        %1838 = vmatprep.subr.bf16.mxu0 0
        %1839 = vmatpush2.bf16.msra.mxu0 %v1539
        %1840 = vmatprep.subr.bf16.mxu0 0
        %1841 = vmatpush2.bf16.msra.mxu0 %v1538
        %1842 = vmatprep.subr.bf16.mxu0 0
        %1843 = vmatpush2.bf16.msra.mxu0 %v1537
        %1844 = vmatprep.subr.bf16.mxu0 0
        %1845 = vmatpush2.bf16.msra.mxu0 %v1536
        %1846 = vmatprep.subr.bf16.mxu0 0
        %1847 = vmatpush2.bf16.msra.mxu0 %v1535
        %1848 = vmatprep.mubr.bf16.mxu0 %v938
        %1849 = vmatmul.mubr.bf16.gmra.mxu0 %v937
        %v1850 = vpop.f32.mrf.mxu0
        %v1851 = vadd.f32 %v1690, %v1850
        %v1852 = vpop.f32.mrf.mxu0
        %v1853 = vpop.f32.mrf.mxu0
        %v1854 = vadd.f32 %v1693, %v1853
        %v1855 = vpop.f32.mrf.mxu0
        %1856 = vmatprep.mubr.bf16.mxu0 %v947
        %1857 = vmatmul.mubr.bf16.gmra.mxu0 %v946
        %v1858 = vpop.f32.mrf.mxu0
        %v1859 = vadd.f32 %v1698, %v1858
        %v1860 = vpop.f32.mrf.mxu0
        %v1861 = vpop.f32.mrf.mxu0
        %v1862 = vadd.f32 %v1701, %v1861
        %v1863 = vpop.f32.mrf.mxu0
        %1864 = vmatprep.mubr.bf16.mxu0 %v956
        %1865 = vmatmul.mubr.bf16.gmra.mxu0 %v955
        %v1866 = vpop.f32.mrf.mxu0
        %v1867 = vadd.f32 %v1706, %v1866
        %v1868 = vpop.f32.mrf.mxu0
        %v1869 = vpop.f32.mrf.mxu0
        %v1870 = vadd.f32 %v1709, %v1869
        %v1871 = vpop.f32.mrf.mxu0
        %1872 = vmatprep.mubr.bf16.mxu0 %v965
        %1873 = vmatmul.mubr.bf16.gmra.mxu0 %v964
        %v1874 = vpop.f32.mrf.mxu0
        %v1875 = vadd.f32 %v1714, %v1874
        %v1876 = vpop.f32.mrf.mxu0
        %v1877 = vpop.f32.mrf.mxu0
        %v1878 = vadd.f32 %v1717, %v1877
        %v1879 = vpop.f32.mrf.mxu0
        %1880 = vmatprep.mubr.bf16.mxu0 %v974
        %1881 = vmatmul.mubr.bf16.gmra.mxu0 %v973
        %v1882 = vpop.f32.mrf.mxu0
        %v1883 = vadd.f32 %v1722, %v1882
        %v1884 = vpop.f32.mrf.mxu0
        %v1885 = vpop.f32.mrf.mxu0
        %v1886 = vadd.f32 %v1725, %v1885
        %v1887 = vpop.f32.mrf.mxu0
        %1888 = vmatprep.mubr.bf16.mxu0 %v983
        %1889 = vmatmul.mubr.bf16.gmra.mxu0 %v982
        %v1890 = vpop.f32.mrf.mxu0
        %v1891 = vadd.f32 %v1730, %v1890
        %v1892 = vpop.f32.mrf.mxu0
        %v1893 = vpop.f32.mrf.mxu0
        %v1894 = vadd.f32 %v1733, %v1893
        %v1895 = vpop.f32.mrf.mxu0
        %1896 = vmatprep.mubr.bf16.mxu0 %v992
        %1897 = vmatmul.mubr.bf16.gmra.mxu0 %v991
        %v1898 = vpop.f32.mrf.mxu0
        %v1899 = vadd.f32 %v1738, %v1898
        %v1900 = vpop.f32.mrf.mxu0
        %v1901 = vpop.f32.mrf.mxu0
        %v1902 = vadd.f32 %v1741, %v1901
        %v1903 = vpop.f32.mrf.mxu0
        %1904 = vmatprep.mubr.bf16.mxu0 %v1001
        %1905 = vmatmul.mubr.bf16.gmra.mxu0 %v1000
        %v1906 = vpop.f32.mrf.mxu0
        %v1907 = vadd.f32 %v1746, %v1906
        %v1908 = vpop.f32.mrf.mxu0
        %v1909 = vpop.f32.mrf.mxu0
        %v1910 = vadd.f32 %v1749, %v1909
        %v1911 = vpop.f32.mrf.mxu0
        %1912 = vmatprep.mubr.bf16.mxu0 %v1010
        %1913 = vmatmul.mubr.bf16.gmra.mxu0 %v1009
        %v1914 = vpop.f32.mrf.mxu0
        %v1915 = vadd.f32 %v1754, %v1914
        %v1916 = vpop.f32.mrf.mxu0
        %v1917 = vpop.f32.mrf.mxu0
        %v1918 = vadd.f32 %v1757, %v1917
        %v1919 = vpop.f32.mrf.mxu0
        %1920 = vmatprep.mubr.bf16.mxu0 %v1019
        %1921 = vmatmul.mubr.bf16.gmra.mxu0 %v1018
        %v1922 = vpop.f32.mrf.mxu0
        %v1923 = vadd.f32 %v1762, %v1922
        %v1924 = vpop.f32.mrf.mxu0
        %v1925 = vpop.f32.mrf.mxu0
        %v1926 = vadd.f32 %v1765, %v1925
        %v1927 = vpop.f32.mrf.mxu0
        %1928 = vmatprep.mubr.bf16.mxu0 %v1028
        %1929 = vmatmul.mubr.bf16.gmra.mxu0 %v1027
        %v1930 = vpop.f32.mrf.mxu0
        %v1931 = vadd.f32 %v1770, %v1930
        %v1932 = vpop.f32.mrf.mxu0
        %v1933 = vpop.f32.mrf.mxu0
        %v1934 = vadd.f32 %v1773, %v1933
        %v1935 = vpop.f32.mrf.mxu0
        %1936 = vmatprep.mubr.bf16.mxu0 %v1037
        %1937 = vmatmul.mubr.bf16.gmra.mxu0 %v1036
        %v1938 = vpop.f32.mrf.mxu0
        %v1939 = vadd.f32 %v1778, %v1938
        %v1940 = vpop.f32.mrf.mxu0
        %v1941 = vpop.f32.mrf.mxu0
        %v1942 = vadd.f32 %v1781, %v1941
        %v1943 = vpop.f32.mrf.mxu0
        %1944 = vmatprep.mubr.bf16.mxu0 %v1046
        %1945 = vmatmul.mubr.bf16.gmra.mxu0 %v1045
        %v1946 = vpop.f32.mrf.mxu0
        %v1947 = vadd.f32 %v1786, %v1946
        %v1948 = vpop.f32.mrf.mxu0
        %v1949 = vpop.f32.mrf.mxu0
        %v1950 = vadd.f32 %v1789, %v1949
        %v1951 = vpop.f32.mrf.mxu0
        %1952 = vmatprep.mubr.bf16.mxu0 %v1055
        %1953 = vmatmul.mubr.bf16.gmra.mxu0 %v1054
        %v1954 = vpop.f32.mrf.mxu0
        %v1955 = vadd.f32 %v1794, %v1954
        %v1956 = vpop.f32.mrf.mxu0
        %v1957 = vpop.f32.mrf.mxu0
        %v1958 = vadd.f32 %v1797, %v1957
        %v1959 = vpop.f32.mrf.mxu0
        %1960 = vmatprep.mubr.bf16.mxu0 %v1064
        %1961 = vmatmul.mubr.bf16.gmra.mxu0 %v1063
        %v1962 = vpop.f32.mrf.mxu0
        %v1963 = vadd.f32 %v1802, %v1962
        %v1964 = vpop.f32.mrf.mxu0
        %v1965 = vpop.f32.mrf.mxu0
        %v1966 = vadd.f32 %v1805, %v1965
        %v1967 = vpop.f32.mrf.mxu0
        %1968 = vmatprep.mubr.bf16.mxu0 %v1073
        %1969 = vmatmul.mubr.bf16.gmra.mxu0 %v1072
        %v1970 = vpop.f32.mrf.mxu0
        %v1971 = vadd.f32 %v1810, %v1970
        %v1972 = vpop.f32.mrf.mxu0
        %v1973 = vpop.f32.mrf.mxu0
        %v1974 = vadd.f32 %v1813, %v1973
        %v1975 = vpop.f32.mrf.mxu0
        %1976 = vdwg.mxu0
        %1977 = vmatprep.subr.bf16.mxu0 0
        %1978 = vmatpush1.bf16.msra.mxu0 %v1550
        %1979 = vmatprep.subr.bf16.mxu0 0
        %1980 = vmatpush1.bf16.msra.mxu0 %v1549
        %1981 = vmatprep.subr.bf16.mxu0 0
        %1982 = vmatpush1.bf16.msra.mxu0 %v1548
        %1983 = vmatprep.subr.bf16.mxu0 0
        %1984 = vmatpush1.bf16.msra.mxu0 %v1547
        %1985 = vmatprep.subr.bf16.mxu0 0
        %1986 = vmatpush1.bf16.msra.mxu0 %v1546
        %1987 = vmatprep.subr.bf16.mxu0 0
        %1988 = vmatpush1.bf16.msra.mxu0 %v1545
        %1989 = vmatprep.subr.bf16.mxu0 0
        %1990 = vmatpush1.bf16.msra.mxu0 %v1544
        %1991 = vmatprep.subr.bf16.mxu0 0
        %1992 = vmatpush1.bf16.msra.mxu0 %v1543
        %1993 = vmatprep.subr.bf16.mxu0 0
        %1994 = vmatpush2.bf16.msra.mxu0 %v1558
        %1995 = vmatprep.subr.bf16.mxu0 0
        %1996 = vmatpush2.bf16.msra.mxu0 %v1557
        %1997 = vmatprep.subr.bf16.mxu0 0
        %1998 = vmatpush2.bf16.msra.mxu0 %v1556
        %1999 = vmatprep.subr.bf16.mxu0 0
        %2000 = vmatpush2.bf16.msra.mxu0 %v1555
        %2001 = vmatprep.subr.bf16.mxu0 0
        %2002 = vmatpush2.bf16.msra.mxu0 %v1554
        %2003 = vmatprep.subr.bf16.mxu0 0
        %2004 = vmatpush2.bf16.msra.mxu0 %v1553
        %2005 = vmatprep.subr.bf16.mxu0 0
        %2006 = vmatpush2.bf16.msra.mxu0 %v1552
        %2007 = vmatprep.subr.bf16.mxu0 0
        %2008 = vmatpush2.bf16.msra.mxu0 %v1551
        %2009 = vmatprep.mubr.bf16.mxu0 %v940
        %2010 = vmatmul.mubr.bf16.gmra.mxu0 %v939
        %v2011 = vpop.f32.mrf.mxu0
        %v2012 = vadd.f32 %v1851, %v2011
        %v2013 = vpop.f32.mrf.mxu0
        %v2014 = vpop.f32.mrf.mxu0
        %v2015 = vadd.f32 %v1854, %v2014
        %v2016 = vpop.f32.mrf.mxu0
        %2017 = vmatprep.mubr.bf16.mxu0 %v949
        %2018 = vmatmul.mubr.bf16.gmra.mxu0 %v948
        %v2019 = vpop.f32.mrf.mxu0
        %v2020 = vadd.f32 %v1859, %v2019
        %v2021 = vpop.f32.mrf.mxu0
        %v2022 = vpop.f32.mrf.mxu0
        %v2023 = vadd.f32 %v1862, %v2022
        %v2024 = vpop.f32.mrf.mxu0
        %2025 = vmatprep.mubr.bf16.mxu0 %v958
        %2026 = vmatmul.mubr.bf16.gmra.mxu0 %v957
        %v2027 = vpop.f32.mrf.mxu0
        %v2028 = vadd.f32 %v1867, %v2027
        %v2029 = vpop.f32.mrf.mxu0
        %v2030 = vpop.f32.mrf.mxu0
        %v2031 = vadd.f32 %v1870, %v2030
        %v2032 = vpop.f32.mrf.mxu0
        %2033 = vmatprep.mubr.bf16.mxu0 %v967
        %2034 = vmatmul.mubr.bf16.gmra.mxu0 %v966
        %v2035 = vpop.f32.mrf.mxu0
        %v2036 = vadd.f32 %v1875, %v2035
        %v2037 = vpop.f32.mrf.mxu0
        %v2038 = vpop.f32.mrf.mxu0
        %v2039 = vadd.f32 %v1878, %v2038
        %v2040 = vpop.f32.mrf.mxu0
        %2041 = vmatprep.mubr.bf16.mxu0 %v976
        %2042 = vmatmul.mubr.bf16.gmra.mxu0 %v975
        %v2043 = vpop.f32.mrf.mxu0
        %v2044 = vadd.f32 %v1883, %v2043
        %v2045 = vpop.f32.mrf.mxu0
        %v2046 = vpop.f32.mrf.mxu0
        %v2047 = vadd.f32 %v1886, %v2046
        %v2048 = vpop.f32.mrf.mxu0
        %2049 = vmatprep.mubr.bf16.mxu0 %v985
        %2050 = vmatmul.mubr.bf16.gmra.mxu0 %v984
        %v2051 = vpop.f32.mrf.mxu0
        %v2052 = vadd.f32 %v1891, %v2051
        %v2053 = vpop.f32.mrf.mxu0
        %v2054 = vpop.f32.mrf.mxu0
        %v2055 = vadd.f32 %v1894, %v2054
        %v2056 = vpop.f32.mrf.mxu0
        %2057 = vmatprep.mubr.bf16.mxu0 %v994
        %2058 = vmatmul.mubr.bf16.gmra.mxu0 %v993
        %v2059 = vpop.f32.mrf.mxu0
        %v2060 = vadd.f32 %v1899, %v2059
        %v2061 = vpop.f32.mrf.mxu0
        %v2062 = vpop.f32.mrf.mxu0
        %v2063 = vadd.f32 %v1902, %v2062
        %v2064 = vpop.f32.mrf.mxu0
        %2065 = vmatprep.mubr.bf16.mxu0 %v1003
        %2066 = vmatmul.mubr.bf16.gmra.mxu0 %v1002
        %v2067 = vpop.f32.mrf.mxu0
        %v2068 = vadd.f32 %v1907, %v2067
        %v2069 = vpop.f32.mrf.mxu0
        %v2070 = vpop.f32.mrf.mxu0
        %v2071 = vadd.f32 %v1910, %v2070
        %v2072 = vpop.f32.mrf.mxu0
        %2073 = vmatprep.mubr.bf16.mxu0 %v1012
        %2074 = vmatmul.mubr.bf16.gmra.mxu0 %v1011
        %v2075 = vpop.f32.mrf.mxu0
        %v2076 = vadd.f32 %v1915, %v2075
        %v2077 = vpop.f32.mrf.mxu0
        %v2078 = vpop.f32.mrf.mxu0
        %v2079 = vadd.f32 %v1918, %v2078
        %v2080 = vpop.f32.mrf.mxu0
        %2081 = vmatprep.mubr.bf16.mxu0 %v1021
        %2082 = vmatmul.mubr.bf16.gmra.mxu0 %v1020
        %v2083 = vpop.f32.mrf.mxu0
        %v2084 = vadd.f32 %v1923, %v2083
        %v2085 = vpop.f32.mrf.mxu0
        %v2086 = vpop.f32.mrf.mxu0
        %v2087 = vadd.f32 %v1926, %v2086
        %v2088 = vpop.f32.mrf.mxu0
        %2089 = vmatprep.mubr.bf16.mxu0 %v1030
        %2090 = vmatmul.mubr.bf16.gmra.mxu0 %v1029
        %v2091 = vpop.f32.mrf.mxu0
        %v2092 = vadd.f32 %v1931, %v2091
        %v2093 = vpop.f32.mrf.mxu0
        %v2094 = vpop.f32.mrf.mxu0
        %v2095 = vadd.f32 %v1934, %v2094
        %v2096 = vpop.f32.mrf.mxu0
        %2097 = vmatprep.mubr.bf16.mxu0 %v1039
        %2098 = vmatmul.mubr.bf16.gmra.mxu0 %v1038
        %v2099 = vpop.f32.mrf.mxu0
        %v2100 = vadd.f32 %v1939, %v2099
        %v2101 = vpop.f32.mrf.mxu0
        %v2102 = vpop.f32.mrf.mxu0
        %v2103 = vadd.f32 %v1942, %v2102
        %v2104 = vpop.f32.mrf.mxu0
        %2105 = vmatprep.mubr.bf16.mxu0 %v1048
        %2106 = vmatmul.mubr.bf16.gmra.mxu0 %v1047
        %v2107 = vpop.f32.mrf.mxu0
        %v2108 = vadd.f32 %v1947, %v2107
        %v2109 = vpop.f32.mrf.mxu0
        %v2110 = vpop.f32.mrf.mxu0
        %v2111 = vadd.f32 %v1950, %v2110
        %v2112 = vpop.f32.mrf.mxu0
        %2113 = vmatprep.mubr.bf16.mxu0 %v1057
        %2114 = vmatmul.mubr.bf16.gmra.mxu0 %v1056
        %v2115 = vpop.f32.mrf.mxu0
        %v2116 = vadd.f32 %v1955, %v2115
        %v2117 = vpop.f32.mrf.mxu0
        %v2118 = vpop.f32.mrf.mxu0
        %v2119 = vadd.f32 %v1958, %v2118
        %v2120 = vpop.f32.mrf.mxu0
        %2121 = vmatprep.mubr.bf16.mxu0 %v1066
        %2122 = vmatmul.mubr.bf16.gmra.mxu0 %v1065
        %v2123 = vpop.f32.mrf.mxu0
        %v2124 = vadd.f32 %v1963, %v2123
        %v2125 = vpop.f32.mrf.mxu0
        %v2126 = vpop.f32.mrf.mxu0
        %v2127 = vadd.f32 %v1966, %v2126
        %v2128 = vpop.f32.mrf.mxu0
        %2129 = vmatprep.mubr.bf16.mxu0 %v1075
        %2130 = vmatmul.mubr.bf16.gmra.mxu0 %v1074
        %v2131 = vpop.f32.mrf.mxu0
        %v2132 = vadd.f32 %v1971, %v2131
        %v2133 = vpop.f32.mrf.mxu0
        %v2134 = vpop.f32.mrf.mxu0
        %v2135 = vadd.f32 %v1974, %v2134
        %v2136 = vpop.f32.mrf.mxu0
        %2137 = vdwg.mxu0
        %2138 = vmatprep.subr.bf16.mxu0 0
        %2139 = vmatpush1.bf16.msra.mxu0 %v1566
        %2140 = vmatprep.subr.bf16.mxu0 0
        %2141 = vmatpush1.bf16.msra.mxu0 %v1565
        %2142 = vmatprep.subr.bf16.mxu0 0
        %2143 = vmatpush1.bf16.msra.mxu0 %v1564
        %2144 = vmatprep.subr.bf16.mxu0 0
        %2145 = vmatpush1.bf16.msra.mxu0 %v1563
        %2146 = vmatprep.subr.bf16.mxu0 0
        %2147 = vmatpush1.bf16.msra.mxu0 %v1562
        %2148 = vmatprep.subr.bf16.mxu0 0
        %2149 = vmatpush1.bf16.msra.mxu0 %v1561
        %2150 = vmatprep.subr.bf16.mxu0 0
        %2151 = vmatpush1.bf16.msra.mxu0 %v1560
        %2152 = vmatprep.subr.bf16.mxu0 0
        %2153 = vmatpush1.bf16.msra.mxu0 %v1559
        %2154 = vmatprep.subr.bf16.mxu0 0
        %2155 = vmatpush2.bf16.msra.mxu0 %v1574
        %2156 = vmatprep.subr.bf16.mxu0 0
        %2157 = vmatpush2.bf16.msra.mxu0 %v1573
        %2158 = vmatprep.subr.bf16.mxu0 0
        %2159 = vmatpush2.bf16.msra.mxu0 %v1572
        %2160 = vmatprep.subr.bf16.mxu0 0
        %2161 = vmatpush2.bf16.msra.mxu0 %v1571
        %2162 = vmatprep.subr.bf16.mxu0 0
        %2163 = vmatpush2.bf16.msra.mxu0 %v1570
        %2164 = vmatprep.subr.bf16.mxu0 0
        %2165 = vmatpush2.bf16.msra.mxu0 %v1569
        %2166 = vmatprep.subr.bf16.mxu0 0
        %2167 = vmatpush2.bf16.msra.mxu0 %v1568
        %2168 = vmatprep.subr.bf16.mxu0 0
        %2169 = vmatpush2.bf16.msra.mxu0 %v1567
        %2170 = vmatprep.mubr.bf16.mxu0 %v942
        %2171 = vmatmul.mubr.bf16.gmra.mxu0 %v941
        %v2172 = vpop.f32.mrf.mxu0
        %v2173 = vadd.f32 %v2012, %v2172
        %v2174 = vpop.f32.mrf.mxu0
        %v2175 = vpop.f32.mrf.mxu0
        %v2176 = vadd.f32 %v2015, %v2175
        %v2177 = vpop.f32.mrf.mxu0
        %2178 = vmatprep.mubr.bf16.mxu0 %v951
        %2179 = vmatmul.mubr.bf16.gmra.mxu0 %v950
        %v2180 = vpop.f32.mrf.mxu0
        %v2181 = vadd.f32 %v2020, %v2180
        %v2182 = vpop.f32.mrf.mxu0
        %v2183 = vpop.f32.mrf.mxu0
        %v2184 = vadd.f32 %v2023, %v2183
        %v2185 = vpop.f32.mrf.mxu0
        %2186 = vmatprep.mubr.bf16.mxu0 %v960
        %2187 = vmatmul.mubr.bf16.gmra.mxu0 %v959
        %v2188 = vpop.f32.mrf.mxu0
        %v2189 = vadd.f32 %v2028, %v2188
        %v2190 = vpop.f32.mrf.mxu0
        %v2191 = vpop.f32.mrf.mxu0
        %v2192 = vadd.f32 %v2031, %v2191
        %v2193 = vpop.f32.mrf.mxu0
        %2194 = vmatprep.mubr.bf16.mxu0 %v969
        %2195 = vmatmul.mubr.bf16.gmra.mxu0 %v968
        %v2196 = vpop.f32.mrf.mxu0
        %v2197 = vadd.f32 %v2036, %v2196
        %v2198 = vpop.f32.mrf.mxu0
        %v2199 = vpop.f32.mrf.mxu0
        %v2200 = vadd.f32 %v2039, %v2199
        %v2201 = vpop.f32.mrf.mxu0
        %2202 = vmatprep.mubr.bf16.mxu0 %v978
        %2203 = vmatmul.mubr.bf16.gmra.mxu0 %v977
        %v2204 = vpop.f32.mrf.mxu0
        %v2205 = vadd.f32 %v2044, %v2204
        %v2206 = vpop.f32.mrf.mxu0
        %v2207 = vpop.f32.mrf.mxu0
        %v2208 = vadd.f32 %v2047, %v2207
        %v2209 = vpop.f32.mrf.mxu0
        %2210 = vmatprep.mubr.bf16.mxu0 %v987
        %2211 = vmatmul.mubr.bf16.gmra.mxu0 %v986
        %v2212 = vpop.f32.mrf.mxu0
        %v2213 = vadd.f32 %v2052, %v2212
        %v2214 = vpop.f32.mrf.mxu0
        %v2215 = vpop.f32.mrf.mxu0
        %v2216 = vadd.f32 %v2055, %v2215
        %v2217 = vpop.f32.mrf.mxu0
        %2218 = vmatprep.mubr.bf16.mxu0 %v996
        %2219 = vmatmul.mubr.bf16.gmra.mxu0 %v995
        %v2220 = vpop.f32.mrf.mxu0
        %v2221 = vadd.f32 %v2060, %v2220
        %v2222 = vpop.f32.mrf.mxu0
        %v2223 = vpop.f32.mrf.mxu0
        %v2224 = vadd.f32 %v2063, %v2223
        %v2225 = vpop.f32.mrf.mxu0
        %2226 = vmatprep.mubr.bf16.mxu0 %v1005
        %2227 = vmatmul.mubr.bf16.gmra.mxu0 %v1004
        %v2228 = vpop.f32.mrf.mxu0
        %v2229 = vadd.f32 %v2068, %v2228
        %v2230 = vpop.f32.mrf.mxu0
        %v2231 = vpop.f32.mrf.mxu0
        %v2232 = vadd.f32 %v2071, %v2231
        %v2233 = vpop.f32.mrf.mxu0
        %2234 = vmatprep.mubr.bf16.mxu0 %v1014
        %2235 = vmatmul.mubr.bf16.gmra.mxu0 %v1013
        %v2236 = vpop.f32.mrf.mxu0
        %v2237 = vadd.f32 %v2076, %v2236
        %v2238 = vpop.f32.mrf.mxu0
        %v2239 = vpop.f32.mrf.mxu0
        %v2240 = vadd.f32 %v2079, %v2239
        %v2241 = vpop.f32.mrf.mxu0
        %2242 = vmatprep.mubr.bf16.mxu0 %v1023
        %2243 = vmatmul.mubr.bf16.gmra.mxu0 %v1022
        %v2244 = vpop.f32.mrf.mxu0
        %v2245 = vadd.f32 %v2084, %v2244
        %v2246 = vpop.f32.mrf.mxu0
        %v2247 = vpop.f32.mrf.mxu0
        %v2248 = vadd.f32 %v2087, %v2247
        %v2249 = vpop.f32.mrf.mxu0
        %2250 = vmatprep.mubr.bf16.mxu0 %v1032
        %2251 = vmatmul.mubr.bf16.gmra.mxu0 %v1031
        %v2252 = vpop.f32.mrf.mxu0
        %v2253 = vadd.f32 %v2092, %v2252
        %v2254 = vpop.f32.mrf.mxu0
        %v2255 = vpop.f32.mrf.mxu0
        %v2256 = vadd.f32 %v2095, %v2255
        %v2257 = vpop.f32.mrf.mxu0
        %2258 = vmatprep.mubr.bf16.mxu0 %v1041
        %2259 = vmatmul.mubr.bf16.gmra.mxu0 %v1040
        %v2260 = vpop.f32.mrf.mxu0
        %v2261 = vadd.f32 %v2100, %v2260
        %v2262 = vpop.f32.mrf.mxu0
        %v2263 = vpop.f32.mrf.mxu0
        %v2264 = vadd.f32 %v2103, %v2263
        %v2265 = vpop.f32.mrf.mxu0
        %2266 = vmatprep.mubr.bf16.mxu0 %v1050
        %2267 = vmatmul.mubr.bf16.gmra.mxu0 %v1049
        %v2268 = vpop.f32.mrf.mxu0
        %v2269 = vadd.f32 %v2108, %v2268
        %v2270 = vpop.f32.mrf.mxu0
        %v2271 = vpop.f32.mrf.mxu0
        %v2272 = vadd.f32 %v2111, %v2271
        %v2273 = vpop.f32.mrf.mxu0
        %2274 = vmatprep.mubr.bf16.mxu0 %v1059
        %2275 = vmatmul.mubr.bf16.gmra.mxu0 %v1058
        %v2276 = vpop.f32.mrf.mxu0
        %v2277 = vadd.f32 %v2116, %v2276
        %v2278 = vpop.f32.mrf.mxu0
        %v2279 = vpop.f32.mrf.mxu0
        %v2280 = vadd.f32 %v2119, %v2279
        %v2281 = vpop.f32.mrf.mxu0
        %2282 = vmatprep.mubr.bf16.mxu0 %v1068
        %2283 = vmatmul.mubr.bf16.gmra.mxu0 %v1067
        %v2284 = vpop.f32.mrf.mxu0
        %v2285 = vadd.f32 %v2124, %v2284
        %v2286 = vpop.f32.mrf.mxu0
        %v2287 = vpop.f32.mrf.mxu0
        %v2288 = vadd.f32 %v2127, %v2287
        %v2289 = vpop.f32.mrf.mxu0
        %2290 = vmatprep.mubr.bf16.mxu0 %v1077
        %2291 = vmatmul.mubr.bf16.gmra.mxu0 %v1076
        %v2292 = vpop.f32.mrf.mxu0
        %v2293 = vadd.f32 %v2132, %v2292
        %v2294 = vpop.f32.mrf.mxu0
        %v2295 = vpop.f32.mrf.mxu0
        %v2296 = vadd.f32 %v2135, %v2295
        %v2297 = vpop.f32.mrf.mxu0
        %2298 = vdwg.mxu0
        %2299 = vmatprep.subr.bf16.mxu0 0
        %2300 = vmatpush1.bf16.msra.mxu0 %v1582
        %2301 = vmatprep.subr.bf16.mxu0 0
        %2302 = vmatpush1.bf16.msra.mxu0 %v1581
        %2303 = vmatprep.subr.bf16.mxu0 0
        %2304 = vmatpush1.bf16.msra.mxu0 %v1580
        %2305 = vmatprep.subr.bf16.mxu0 0
        %2306 = vmatpush1.bf16.msra.mxu0 %v1579
        %2307 = vmatprep.subr.bf16.mxu0 0
        %2308 = vmatpush1.bf16.msra.mxu0 %v1578
        %2309 = vmatprep.subr.bf16.mxu0 0
        %2310 = vmatpush1.bf16.msra.mxu0 %v1577
        %2311 = vmatprep.subr.bf16.mxu0 0
        %2312 = vmatpush1.bf16.msra.mxu0 %v1576
        %2313 = vmatprep.subr.bf16.mxu0 0
        %2314 = vmatpush1.bf16.msra.mxu0 %v1575
        %2315 = vmatprep.subr.bf16.mxu0 0
        %2316 = vmatpush2.bf16.msra.mxu0 0
        %2317 = vmatprep.subr.bf16.mxu0 0
        %2318 = vmatpush2.bf16.msra.mxu0 0
        %2319 = vmatprep.subr.bf16.mxu0 0
        %2320 = vmatpush2.bf16.msra.mxu0 0
        %2321 = vmatprep.subr.bf16.mxu0 0
        %2322 = vmatpush2.bf16.msra.mxu0 0
        %2323 = vmatprep.subr.bf16.mxu0 0
        %2324 = vmatpush2.bf16.msra.mxu0 0
        %2325 = vmatprep.subr.bf16.mxu0 0
        %2326 = vmatpush2.bf16.msra.mxu0 0
        %2327 = vmatprep.subr.bf16.mxu0 0
        %2328 = vmatpush2.bf16.msra.mxu0 0
        %2329 = vmatprep.subr.bf16.mxu0 0
        %2330 = vmatpush2.bf16.msra.mxu0 0
        %2331 = vmatprep.mubr.bf16.mxu0 0
        %2332 = vmatmul.mubr.bf16.gmra.mxu0 %v943
        %v2333 = vpop.f32.mrf.mxu0
        %v2334 = vadd.f32 %v2173, %v2333
        %v2335 = vpop.f32.mrf.mxu0
        %v2336 = vpop.f32.mrf.mxu0
        %v2337 = vadd.f32 %v2176, %v2336
        %v2338 = vpop.f32.mrf.mxu0
        %2339 = vmatprep.mubr.bf16.mxu0 0
        %2340 = vmatmul.mubr.bf16.gmra.mxu0 %v952
        %v2341 = vpop.f32.mrf.mxu0
        %v2342 = vadd.f32 %v2181, %v2341
        %v2343 = vpop.f32.mrf.mxu0
        %v2344 = vpop.f32.mrf.mxu0
        %v2345 = vadd.f32 %v2184, %v2344
        %v2346 = vpop.f32.mrf.mxu0
        %2347 = vmatprep.mubr.bf16.mxu0 0
        %2348 = vmatmul.mubr.bf16.gmra.mxu0 %v961
        %v2349 = vpop.f32.mrf.mxu0
        %v2350 = vadd.f32 %v2189, %v2349
        %v2351 = vpop.f32.mrf.mxu0
        %v2352 = vpop.f32.mrf.mxu0
        %v2353 = vadd.f32 %v2192, %v2352
        %v2354 = vpop.f32.mrf.mxu0
        %2355 = vmatprep.mubr.bf16.mxu0 0
        %2356 = vmatmul.mubr.bf16.gmra.mxu0 %v970
        %v2357 = vpop.f32.mrf.mxu0
        %v2358 = vadd.f32 %v2197, %v2357
        %v2359 = vpop.f32.mrf.mxu0
        %v2360 = vpop.f32.mrf.mxu0
        %v2361 = vadd.f32 %v2200, %v2360
        %v2362 = vpop.f32.mrf.mxu0
        %2363 = vmatprep.mubr.bf16.mxu0 0
        %2364 = vmatmul.mubr.bf16.gmra.mxu0 %v979
        %v2365 = vpop.f32.mrf.mxu0
        %v2366 = vadd.f32 %v2205, %v2365
        %v2367 = vpop.f32.mrf.mxu0
        %v2368 = vpop.f32.mrf.mxu0
        %v2369 = vadd.f32 %v2208, %v2368
        %v2370 = vpop.f32.mrf.mxu0
        %2371 = vmatprep.mubr.bf16.mxu0 0
        %2372 = vmatmul.mubr.bf16.gmra.mxu0 %v988
        %v2373 = vpop.f32.mrf.mxu0
        %v2374 = vadd.f32 %v2213, %v2373
        %v2375 = vpop.f32.mrf.mxu0
        %v2376 = vpop.f32.mrf.mxu0
        %v2377 = vadd.f32 %v2216, %v2376
        %v2378 = vpop.f32.mrf.mxu0
        %2379 = vmatprep.mubr.bf16.mxu0 0
        %2380 = vmatmul.mubr.bf16.gmra.mxu0 %v997
        %v2381 = vpop.f32.mrf.mxu0
        %v2382 = vadd.f32 %v2221, %v2381
        %v2383 = vpop.f32.mrf.mxu0
        %v2384 = vpop.f32.mrf.mxu0
        %v2385 = vadd.f32 %v2224, %v2384
        %v2386 = vpop.f32.mrf.mxu0
        %2387 = vmatprep.mubr.bf16.mxu0 0
        %2388 = vmatmul.mubr.bf16.gmra.mxu0 %v1006
        %v2389 = vpop.f32.mrf.mxu0
        %v2390 = vadd.f32 %v2229, %v2389
        %v2391 = vpop.f32.mrf.mxu0
        %v2392 = vpop.f32.mrf.mxu0
        %v2393 = vadd.f32 %v2232, %v2392
        %v2394 = vpop.f32.mrf.mxu0
        %2395 = vmatprep.mubr.bf16.mxu0 0
        %2396 = vmatmul.mubr.bf16.gmra.mxu0 %v1015
        %v2397 = vpop.f32.mrf.mxu0
        %v2398 = vadd.f32 %v2237, %v2397
        %v2399 = vpop.f32.mrf.mxu0
        %v2400 = vpop.f32.mrf.mxu0
        %v2401 = vadd.f32 %v2240, %v2400
        %v2402 = vpop.f32.mrf.mxu0
        %2403 = vmatprep.mubr.bf16.mxu0 0
        %2404 = vmatmul.mubr.bf16.gmra.mxu0 %v1024
        %v2405 = vpop.f32.mrf.mxu0
        %v2406 = vadd.f32 %v2245, %v2405
        %v2407 = vpop.f32.mrf.mxu0
        %v2408 = vpop.f32.mrf.mxu0
        %v2409 = vadd.f32 %v2248, %v2408
        %v2410 = vpop.f32.mrf.mxu0
        %2411 = vmatprep.mubr.bf16.mxu0 0
        %2412 = vmatmul.mubr.bf16.gmra.mxu0 %v1033
        %v2413 = vpop.f32.mrf.mxu0
        %v2414 = vadd.f32 %v2253, %v2413
        %v2415 = vpop.f32.mrf.mxu0
        %v2416 = vpop.f32.mrf.mxu0
        %v2417 = vadd.f32 %v2256, %v2416
        %v2418 = vpop.f32.mrf.mxu0
        %2419 = vmatprep.mubr.bf16.mxu0 0
        %2420 = vmatmul.mubr.bf16.gmra.mxu0 %v1042
        %v2421 = vpop.f32.mrf.mxu0
        %v2422 = vadd.f32 %v2261, %v2421
        %v2423 = vpop.f32.mrf.mxu0
        %v2424 = vpop.f32.mrf.mxu0
        %v2425 = vadd.f32 %v2264, %v2424
        %v2426 = vpop.f32.mrf.mxu0
        %2427 = vmatprep.mubr.bf16.mxu0 0
        %2428 = vmatmul.mubr.bf16.gmra.mxu0 %v1051
        %v2429 = vpop.f32.mrf.mxu0
        %v2430 = vadd.f32 %v2269, %v2429
        %v2431 = vpop.f32.mrf.mxu0
        %v2432 = vpop.f32.mrf.mxu0
        %v2433 = vadd.f32 %v2272, %v2432
        %v2434 = vpop.f32.mrf.mxu0
        %2435 = vmatprep.mubr.bf16.mxu0 0
        %2436 = vmatmul.mubr.bf16.gmra.mxu0 %v1060
        %v2437 = vpop.f32.mrf.mxu0
        %v2438 = vadd.f32 %v2277, %v2437
        %v2439 = vpop.f32.mrf.mxu0
        %v2440 = vpop.f32.mrf.mxu0
        %v2441 = vadd.f32 %v2280, %v2440
        %v2442 = vpop.f32.mrf.mxu0
        %2443 = vmatprep.mubr.bf16.mxu0 0
        %2444 = vmatmul.mubr.bf16.gmra.mxu0 %v1069
        %v2445 = vpop.f32.mrf.mxu0
        %v2446 = vadd.f32 %v2285, %v2445
        %v2447 = vpop.f32.mrf.mxu0
        %v2448 = vpop.f32.mrf.mxu0
        %v2449 = vadd.f32 %v2288, %v2448
        %v2450 = vpop.f32.mrf.mxu0
        %2451 = vmatprep.mubr.bf16.mxu0 0
        %2452 = vmatmul.mubr.bf16.gmra.mxu0 %v1078
        %v2453 = vpop.f32.mrf.mxu0
        %v2454 = vadd.f32 %v2293, %v2453
        %v2455 = vpop.f32.mrf.mxu0
        %v2456 = vpop.f32.mrf.mxu0
        %v2457 = vadd.f32 %v2296, %v2456
        %v2458 = vpop.f32.mrf.mxu0
        %2459 = vdwg.mxu0
        %v2460 = vmax.f32 %v2334, 0.0
        %v2461 = vmax.f32 %v2337, 0.0
        %v2462 = vmax.f32 %v2342, 0.0
        %v2463 = vmax.f32 %v2345, 0.0
        %v2464 = vmax.f32 %v2350, 0.0
        %v2465 = vmax.f32 %v2353, 0.0
        %v2466 = vmax.f32 %v2358, 0.0
        %v2467 = vmax.f32 %v2361, 0.0
        %v2468 = vmax.f32 %v2366, 0.0
        %v2469 = vmax.f32 %v2369, 0.0
        %v2470 = vmax.f32 %v2374, 0.0
        %v2471 = vmax.f32 %v2377, 0.0
        %v2472 = vmax.f32 %v2382, 0.0
        %v2473 = vmax.f32 %v2385, 0.0
        %v2474 = vmax.f32 %v2390, 0.0
        %v2475 = vmax.f32 %v2393, 0.0
        %v2476 = vmax.f32 %v2398, 0.0
        %v2477 = vmax.f32 %v2401, 0.0
        %v2478 = vmax.f32 %v2406, 0.0
        %v2479 = vmax.f32 %v2409, 0.0
        %v2480 = vmax.f32 %v2414, 0.0
        %v2481 = vmax.f32 %v2417, 0.0
        %v2482 = vmax.f32 %v2422, 0.0
        %v2483 = vmax.f32 %v2425, 0.0
        %v2484 = vmax.f32 %v2430, 0.0
        %v2485 = vmax.f32 %v2433, 0.0
        %v2486 = vmax.f32 %v2438, 0.0
        %v2487 = vmax.f32 %v2441, 0.0
        %v2488 = vmax.f32 %v2446, 0.0
        %v2489 = vmax.f32 %v2449, 0.0
        %v2490 = vmax.f32 %v2454, 0.0
        %v2491 = vmax.f32 %v2457, 0.0
        %v2492 = vpack.c.bf16 %v2461, %v2460
        %v2493 = vpack.c.bf16 %v2463, %v2462
        %v2494 = vpack.c.bf16 %v2465, %v2464
        %v2495 = vpack.c.bf16 %v2467, %v2466
        %v2496 = vpack.c.bf16 %v2469, %v2468
        %v2497 = vpack.c.bf16 %v2471, %v2470
        %v2498 = vpack.c.bf16 %v2473, %v2472
        %v2499 = vpack.c.bf16 %v2475, %v2474
        %v2500 = vpack.c.bf16 %v2477, %v2476
        %v2501 = vpack.c.bf16 %v2479, %v2478
        %v2502 = vpack.c.bf16 %v2481, %v2480
        %v2503 = vpack.c.bf16 %v2483, %v2482
        %v2504 = vpack.c.bf16 %v2485, %v2484
        %v2505 = vpack.c.bf16 %v2487, %v2486
        %v2506 = vpack.c.bf16 %v2489, %v2488
        %v2507 = vpack.c.bf16 %v2491, %v2490
        %v2524 = vunpack.c.l.b16 %v2492
        %v2525 = vunpack.c.h.b16 %v2492
        %v2526 = vunpack.c.l.b16 %v2493
        %v2527 = vunpack.c.h.b16 %v2493
        %v2528 = vunpack.c.l.b16 %v2494
        %v2529 = vunpack.c.h.b16 %v2494
        %v2530 = vunpack.c.l.b16 %v2495
        %v2531 = vunpack.c.h.b16 %v2495
        %v2532 = vunpack.c.l.b16 %v2496
        %v2533 = vunpack.c.h.b16 %v2496
        %v2534 = vunpack.c.l.b16 %v2497
        %v2535 = vunpack.c.h.b16 %v2497
        %v2536 = vunpack.c.l.b16 %v2498
        %v2537 = vunpack.c.h.b16 %v2498
        %v2538 = vunpack.c.l.b16 %v2499
        %v2539 = vunpack.c.h.b16 %v2499
        %v2540 = vunpack.c.l.b16 %v2500
        %v2541 = vunpack.c.h.b16 %v2500
        %v2542 = vunpack.c.l.b16 %v2501
        %v2543 = vunpack.c.h.b16 %v2501
        %v2544 = vunpack.c.l.b16 %v2502
        %v2545 = vunpack.c.h.b16 %v2502
        %v2546 = vunpack.c.l.b16 %v2503
        %v2547 = vunpack.c.h.b16 %v2503
        %v2548 = vunpack.c.l.b16 %v2504
        %v2549 = vunpack.c.h.b16 %v2504
        %v2550 = vunpack.c.l.b16 %v2505
        %v2551 = vunpack.c.h.b16 %v2505
        %v2552 = vunpack.c.l.b16 %v2506
        %v2553 = vunpack.c.h.b16 %v2506
        %v2554 = vunpack.c.l.b16 %v2507
        %v2555 = vunpack.c.h.b16 %v2507
        %v2556 = vpack.c.b16 %v2524, %v2524
        %v2557 = vpack.c.b16 %v2525, %v2525
        %v2558 = vpack.c.b16 %v2526, %v2526
        %v2559 = vpack.c.b16 %v2527, %v2527
        %v2560 = vpack.c.b16 %v2528, %v2528
        %v2561 = vpack.c.b16 %v2529, %v2529
        %v2562 = vpack.c.b16 %v2530, %v2530
        %v2563 = vpack.c.b16 %v2531, %v2531
        %v2564 = vpack.c.b16 %v2532, %v2532
        %v2565 = vpack.c.b16 %v2533, %v2533
        %v2566 = vpack.c.b16 %v2534, %v2534
        %v2567 = vpack.c.b16 %v2535, %v2535
        %v2568 = vpack.c.b16 %v2536, %v2536
        %v2569 = vpack.c.b16 %v2537, %v2537
        %v2570 = vpack.c.b16 %v2538, %v2538
        %v2571 = vpack.c.b16 %v2539, %v2539
        %v2572 = vpack.c.b16 %v2540, %v2540
        %v2573 = vpack.c.b16 %v2541, %v2541
        %v2574 = vpack.c.b16 %v2542, %v2542
        %v2575 = vpack.c.b16 %v2543, %v2543
        %v2576 = vpack.c.b16 %v2544, %v2544
        %v2577 = vpack.c.b16 %v2545, %v2545
        %v2578 = vpack.c.b16 %v2546, %v2546
        %v2579 = vpack.c.b16 %v2547, %v2547
        %v2580 = vpack.c.b16 %v2548, %v2548
        %v2581 = vpack.c.b16 %v2549, %v2549
        %v2582 = vpack.c.b16 %v2550, %v2550
        %v2583 = vpack.c.b16 %v2551, %v2551
        %v2584 = vpack.c.b16 %v2552, %v2552
        %v2585 = vpack.c.b16 %v2553, %v2553
        %v2586 = vpack.c.b16 %v2554, %v2554
        %v2587 = vpack.c.b16 %v2555, %v2555
        %2620 = vst [vmem:[%s166] sm:$0xf] %v2556
        %2621 = vst [vmem:[%s166 + $0x4] sm:$0xf] %v2557
        %2622 = vst [vmem:[%s166 + $0x8] sm:$0xf] %v2558
        %2623 = vst [vmem:[%s166 + $0xc] sm:$0xf] %v2559
        %2624 = vst [vmem:[%s166 + $0x10] sm:$0xf] %v2560
        %2625 = vst [vmem:[%s166 + $0x14] sm:$0xf] %v2561
        %2626 = vst [vmem:[%s166 + $0x18] sm:$0xf] %v2562
        %2627 = vst [vmem:[%s166 + $0x1c] sm:$0xf] %v2563
        %2628 = vst [vmem:[%s166 + $0x20] sm:$0xf] %v2564
        %2629 = vst [vmem:[%s166 + $0x24] sm:$0xf] %v2565
        %2630 = vst [vmem:[%s166 + $0x28] sm:$0xf] %v2566
        %2631 = vst [vmem:[%s166 + $0x2c] sm:$0xf] %v2567
        %2632 = vst [vmem:[%s166 + $0x30] sm:$0xf] %v2568
        %2633 = vst [vmem:[%s166 + $0x34] sm:$0xf] %v2569
        %2634 = vst [vmem:[%s166 + $0x38] sm:$0xf] %v2570
        %2635 = vst [vmem:[%s166 + $0x3c] sm:$0xf] %v2571
        %2636 = vst [vmem:[%s166 + $0x40] sm:$0xf] %v2572
        %2637 = vst [vmem:[%s166 + $0x44] sm:$0xf] %v2573
        %2638 = vst [vmem:[%s166 + $0x48] sm:$0xf] %v2574
        %2639 = vst [vmem:[%s166 + $0x4c] sm:$0xf] %v2575
        %2640 = vst [vmem:[%s166 + $0x50] sm:$0xf] %v2576
        %2641 = vst [vmem:[%s166 + $0x54] sm:$0xf] %v2577
        %2642 = vst [vmem:[%s166 + $0x58] sm:$0xf] %v2578
        %2643 = vst [vmem:[%s166 + $0x5c] sm:$0xf] %v2579
        %2644 = vst [vmem:[%s166 + $0x60] sm:$0xf] %v2580
        %2645 = vst [vmem:[%s166 + $0x64] sm:$0xf] %v2581
        %2646 = vst [vmem:[%s166 + $0x68] sm:$0xf] %v2582
        %2647 = vst [vmem:[%s166 + $0x6c] sm:$0xf] %v2583
        %2648 = vst [vmem:[%s166 + $0x70] sm:$0xf] %v2584
        %2649 = vst [vmem:[%s166 + $0x74] sm:$0xf] %v2585
        %2650 = vst [vmem:[%s166 + $0x78] sm:$0xf] %v2586
        %2651 = vst [vmem:[%s166 + $0x7c] sm:$0xf] %v2587
        %s2652 = sand.u32 %s93, 1
        %s2653 = scalar_lea.sflag [#allocation3], %s2652
        %s2654 = sand.u32 %s93, 1
        %s2655 = smul.addr %s2654, 128
        %s2656 = scalar_lea.vmem [#allocation2], %s2655
        // Predicated region
        $region33: #{encoder_forward.1} parent=31 // pred_check
          %p2657 = pneg %p103
        $region34: #{encoder_forward.1} parent=31 // pred_check_branch
          %2659 = sbr.rel (%p2657) target = $region36
        $region35: #{encoder_forward.1} parent=31 // pred_region
          %s2660 = smul.u32 32, %s17
          %s2662 = ssub.s32 2048, 2048
          %2663 = vsyncadd %s2653, %s2662
          %s2664 = smul.addr %s2660, 64
          %s2665 = scalar_lea.hbm %s3, %s2664
          %s2666 = sshll.u32 %s2656, 4
          %s2667 = int_to_ptr.vmem [resolvable:$true] %s2666
          %2672 = dma.vmem_to_hbm [thread:$0]  %s2667, 2048, %s2665, %s2653, 64, 64, 4
        $region36: #{encoder_forward.1} parent=31 // pred_fallthru
          _
      $region32: #{encoder_forward.1} parent=5 // pred_fallthru
        _
      %p2673 = scmp.le.s32.totalorder 2, %s12
      // Predicated region
      $region37: #{encoder_forward.1} parent=5 // pred_check
        %p2674 = pneg %p2673
      $region38: #{encoder_forward.1} parent=5 // pred_check_branch
        %2676 = sbr.rel (%p2674) target = $region40
      $region39: #{encoder_forward.1} parent=5 // pred_region
        %s2677 = ssub.s32 %s12, 2
        // Predicated region
        $region41: #{encoder_forward.1} parent=39 // pred_check
          %p2678 = pneg %p109
        $region42: #{encoder_forward.1} parent=39 // pred_check_branch
          %2680 = sbr.rel (%p2678) target = $region44
        $region43: #{encoder_forward.1} parent=39 // pred_region
          %s2681 = sand.u32 %s94, 1
          %s2682 = scalar_lea.sflag [#allocation3], %s2681
          %s2683 = sand.u32 %s94, 1
          %s2684 = smul.addr %s2683, 128
          %s2685 = scalar_lea.vmem [#allocation2], %s2684
          %2686 = dma.done %s2682, 2048
        $region44: #{encoder_forward.1} parent=39 // pred_fallthru
          _
      $region40: #{encoder_forward.1} parent=5 // pred_fallthru
        _
    $region6: #{encoder_forward.1} parent=1 // loop_footer
      %s16 = sadd.s32 1, %s12
    $region7: #{encoder_forward.1} parent=1 // loop_footer_branch
      %11 = sbr.rel target = $region3
    $region8: #{encoder_forward.1} parent=1 // loop_exit
      _
    %2687 = vsyncpa [#allocation3], 1
    %s2688 = scalar_lea.sflag [#allocation3], 1
    %2689 = vsyncpa %s2688, 1

</llo_original>
